<compile_context>
chip_gen: v7x
topology: tpu7x:2x2x1
jax: 0.10.0
libtpu: 0.0.40
codegen_flags: <defaults>
</compile_context>

<pallas_src>
import numpy as np
import jax
import jax.numpy as jnp
from jax import lax
from jax.experimental import pallas as pl
from jax.experimental.pallas import tpu as pltpu


# ----------------------------- config (small) ------------------------------
BATCH_SIZE = 2
NUM_FILTERS1 = 4
NUM_FILTERS2 = 8
KERNEL1, STRIDE1 = 5, 5
KERNEL2, STRIDE2 = 5, 5
OUTPUT_FC1 = 32
OUTPUT_FC2 = 16
HIDDEN_LSTM = 32          # 4*H = 128 -> lane-dense LSTM gate matmul
IN_CHANNELS = 2           # forward only uses channel 0:  x[:, 0, None, :, :]
IN_H = 25                 # so that height collapses to 1 after conv2
IN_W = 450                # fc1 input dim in the module is hard-coded from 450
BN_EPS = 1e-5

# derived spatial sizes (stride == kernel -> exact, non-overlapping patches)
H1 = (IN_H - KERNEL1) // STRIDE1 + 1          # 5
W1 = (IN_W - KERNEL1) // STRIDE1 + 1          # 90
W1P = W1 // 2                                 # 45 after the (1,2) max-pool
H2 = (H1 - KERNEL2) // STRIDE2 + 1            # 1
W2 = (W1P - KERNEL2) // STRIDE2 + 1           # 9
FC1_IN = W2 * NUM_FILTERS2                    # 72 == module's hard-coded formula

NPOS = H1 * W1P                               # 225 pooled positions per (b, branch)
NPOSP = ((NPOS + 127) // 128) * 128           # 256, lane-tile aligned
NCOLS = 2 * NPOSP                             # 512 = even/odd halves side by side

assert KERNEL1 == STRIDE1 and KERNEL2 == STRIDE2     # im2col == pure reshape
assert H1 == KERNEL2 and H2 == 1 and W1 % 2 == 0     # layout assumptions below

_VMEM = pl.BlockSpec(memory_space=pltpu.MemorySpace.VMEM)


def _kpad(batch):
  """conv1 contraction length (2B*25) rounded up to a multiple of 128."""
  return ((2 * batch * KERNEL1 * KERNEL1 + 127) // 128) * 128


# ============================ the fused kernel ==============================
def _vrkinnn_kernel(x_ref, w1bd_ref, b1_ref, w2s_ref, b2_ref,
                    wfc1_ref, bfc1_ref, wxh_ref, bl_ref,
                    wfc2_ref, bfc2_ref, wout_ref, bout_ref, out_ref):
  f32 = jnp.float32
  B = out_ref.shape[0]                  # module batch == LSTM sequence length
  nbb = 2 * B                           # rows = (batch, branch)
  H = wfc2_ref.shape[0]                 # 32; gates are 4H = 128 lanes
  npos = w2s_ref.shape[1]               # 256 padded pooled positions

  x = x_ref[...]                        # (KPAD, 512) bf16 im2col patches

  # ---- conv1(+BN1) + ReLU + (1,2) max-pool + conv2(+BN2), summed over the
  #      4 conv1 channels; rows stay (batch, branch), no relayout anywhere. ----
  acc = jnp.zeros((nbb, b2_ref.shape[1]), f32)
  for c1 in range(NUM_FILTERS1):
    pre = jnp.dot(w1bd_ref[c1], x, preferred_element_type=f32)      # (nbb, 512)
    act = jnp.maximum(pre + b1_ref[c1], 0.0)                        # BN bias+ReLU
    pooled = jnp.maximum(act[:, :npos], act[:, npos:])              # (nbb, 256)
    acc = acc + jnp.dot(pooled.astype(jnp.bfloat16), w2s_ref[c1],
                        preferred_element_type=f32)                 # (nbb, 72)
  c2out = jnp.maximum(acc + b2_ref[...], 0.0)                       # conv2+BN2+ReLU

  # ---- fc1 (channel-major flatten absorbed into the weight row permute) ----
  fc1x = jnp.dot(c2out, wfc1_ref[...], preferred_element_type=f32) + bfc1_ref[...]

  # ---- LSTM: seq_len = module batch B, batch = 2 siamese branches,
  #      h0 = c0 = 0, loop fully unrolled; fused [x,h] gate matmul. ----
  wxh = wxh_ref[...]                    # (64, 128) rows = [x-part; h-part]
  bl = bl_ref[...]                      # (1, 128)  b_ih + b_hh
  wfc2 = wfc2_ref[...]                  # (32, 16)
  bfc2 = bfc2_ref[...]                  # (1, 16)
  row_sign = jnp.where(
      lax.broadcasted_iota(jnp.int32, (2, wfc2.shape[1]), 0) == 0, 1.0, -1.0)

  h = jnp.zeros((2, H), f32)
  c = jnp.zeros((2, H), f32)
  d_rows = []
  for t in range(B):
    x_t = fc1x[2 * t:2 * t + 2, :]                                  # (2, 32)
    if t == 0:                                                      # h == 0
      gates = jnp.dot(x_t, wxh[:x_t.shape[1], :],
                      preferred_element_type=f32) + bl
    else:
      gates = jnp.dot(jnp.concatenate([x_t, h], axis=1), wxh,
                      preferred_element_type=f32) + bl              # (2, 128)
    sg = jax.nn.sigmoid(gates)          # full 128-lane vreg on the EUP
    tg = jnp.tanh(gates)
    i_g = sg[:, 0 * H:1 * H]
    f_g = sg[:, 1 * H:2 * H]
    g_g = tg[:, 2 * H:3 * H]
    o_g = sg[:, 3 * H:4 * H]
    if t == 0:
      c = i_g * g_g
    else:
      c = f_g * c + i_g * g_g
    h = o_g * jnp.tanh(c)
    g2 = jnp.dot(h, wfc2, preferred_element_type=f32) + bfc2        # (2, 16)
    d_rows.append(jnp.abs(jnp.sum(g2 * row_sign, axis=0, keepdims=True)))

  d = jnp.concatenate(d_rows, axis=0)                               # (B, 16)
  # fcOut has a single output column -> VPU multiply + lane reduce (no MXU)
  z = jnp.sum(d * wout_ref[...], axis=-1, keepdims=True) + bout_ref[...]
  out_ref[...] = jax.nn.sigmoid(z)                                  # (B, 1)


# --------------------- one-time weight preparation (host) -------------------
def prepare_params(params, batch_size=BATCH_SIZE):
  """Fold BN, build block-diag / permuted weights.  Call ONCE, outside jit."""
  f32, bf16 = jnp.float32, jnp.bfloat16
  nbb = 2 * batch_size
  kpad = _kpad(batch_size)

  # fold BN1 into conv1
  s1 = params['bn1_g'] * lax.rsqrt(params['bn1_v'] + BN_EPS)
  w1f = params['conv1_w'].reshape(NUM_FILTERS1, KERNEL1 * KERNEL1) * s1[:, None]
  b1f = (params['conv1_b'] - params['bn1_m']) * s1 + params['bn1_b']
  # block-diagonal-over-(b,branch) conv1 weight: [c1, bb, bb'*25+k] = d(bb,bb')*w
  eye_bb = jnp.eye(nbb, dtype=f32)
  w1bd = jnp.einsum('ck,be->cbek', w1f.astype(f32), eye_bb).reshape(
      NUM_FILTERS1, nbb, nbb * KERNEL1 * KERNEL1)
  w1bd = jnp.pad(w1bd, ((0, 0), (0, 0), (0, kpad - nbb * KERNEL1 * KERNEL1)))
  b1rep = jnp.broadcast_to(b1f[:, None, None], (NUM_FILTERS1, nbb, 1)).astype(f32)

  # fold BN2 into conv2; scatter to per-input-channel (256, 72) weights,
  # rows = pooled position (kh*45 + w2*5 + kw), cols = (w2, c2); padded rows = 0.
  s2 = params['bn2_g'] * lax.rsqrt(params['bn2_v'] + BN_EPS)
  w2f = params['conv2_w'] * s2[:, None, None, None]                 # (8, 4, 5, 5)
  b2f = (params['conv2_b'] - params['bn2_m']) * s2 + params['bn2_b']
  eye_w2 = jnp.eye(W2, dtype=f32)
  w2s = jnp.einsum('nirs,ab->irasbn', w2f.astype(f32), eye_w2).reshape(
      NUM_FILTERS1, NPOS, W2 * NUM_FILTERS2)
  w2s = jnp.pad(w2s, ((0, 0), (0, NPOSP - NPOS), (0, 0)))
  b2row = jnp.tile(b2f, (W2,)).reshape(1, W2 * NUM_FILTERS2)

  # fc1 with the NCHW channel-major flatten absorbed into a row permutation
  wfc1p = params['fc1_w'].reshape(OUTPUT_FC1, NUM_FILTERS2, W2).transpose(
      2, 1, 0).reshape(W2 * NUM_FILTERS2, OUTPUT_FC1)

  # LSTM: concatenated [x; h] gate weight (gate order i, f, g, o), merged bias
  wxh = jnp.concatenate([params['lstm_wih'].T, params['lstm_whh'].T], axis=0)
  bl = (params['lstm_bih'] + params['lstm_bhh']).reshape(1, 4 * HIDDEN_LSTM)

  return (
      w1bd.astype(bf16), b1rep,
      w2s.astype(bf16), b2row.astype(f32),
      wfc1p.astype(f32), params['fc1_b'].reshape(1, OUTPUT_FC1).astype(f32),
      wxh.astype(f32), bl.astype(f32),
      params['fc2_w'].T.astype(f32),
      params['fc2_b'].reshape(1, OUTPUT_FC2).astype(f32),
      params['fcOut_w'].reshape(1, OUTPUT_FC2).astype(f32),
      params['fcOut_b'].reshape(1, 1).astype(f32),
  )


# ------------------------------ jitted forward ------------------------------
@jax.jit
def vrkinnn_forward(prepared, x1, x2):
  B = x1.shape[0]
  nbb = 2 * B
  f32 = jnp.float32

  # im2col for conv1 as pure reshapes (stride == kernel):
  # rows = (bb, kh, kw) [zero-padded to KPAD], cols = (even/odd, h1, wp) with
  # each half zero-padded 225 -> 256 lanes.
  x = jnp.stack([x1[:, 0, :, :], x2[:, 0, :, :]], axis=1).reshape(
      nbb, IN_H, IN_W).astype(f32)
  x = x.reshape(nbb, H1, KERNEL1, W1P, 2, KERNEL1)     # (bb, h1, kh, wp, e, kw)
  x = x.transpose(0, 2, 5, 4, 1, 3)                    # (bb, kh, kw, e, h1, wp)
  x = x.reshape(nbb * KERNEL1 * KERNEL1, 2, NPOS)
  x = jnp.pad(x, ((0, _kpad(B) - nbb * KERNEL1 * KERNEL1),
                  (0, 0), (0, NPOSP - NPOS)))
  x = x.reshape(-1, NCOLS).astype(jnp.bfloat16)        # (KPAD, 512)

  out = pl.pallas_call(
      _vrkinnn_kernel,
      out_shape=jax.ShapeDtypeStruct((B, 1), f32),
      in_specs=[_VMEM] * 13,
      out_specs=_VMEM,
  )(x, *prepared)
  # TODO(synk): for batch >> 2 on v7x, add a ("parallel",) grid over (b, branch)
  # to use the second TensorCore; at B=2 a grid only adds per-step overhead.
  return out                                           # f32 (B, 1); f64 cast on host


# --------------------------- deterministic params ---------------------------
def init_params(key):
  ks = jax.random.split(key, 20)
  n = lambda k, shape, s=0.1: (s * jax.random.normal(k, shape)).astype(jnp.float32)
  p = {
      'conv1_w': n(ks[0], (NUM_FILTERS1, 1, KERNEL1, KERNEL1)),
      'conv1_b': n(ks[1], (NUM_FILTERS1,)),
      'bn1_g': 1.0 + n(ks[2], (NUM_FILTERS1,)),
      'bn1_b': n(ks[3], (NUM_FILTERS1,)),
      'bn1_m': n(ks[4], (NUM_FILTERS1,)),
      'bn1_v': 1.0 + jnp.abs(n(ks[5], (NUM_FILTERS1,))),
      'conv2_w': n(ks[6], (NUM_FILTERS2, NUM_FILTERS1, KERNEL2, KERNEL2)),
      'conv2_b': n(ks[7], (NUM_FILTERS2,)),
      'bn2_g': 1.0 + n(ks[8], (NUM_FILTERS2,)),
      'bn2_b': n(ks[9], (NUM_FILTERS2,)),
      'bn2_m': n(ks[10], (NUM_FILTERS2,)),
      'bn2_v': 1.0 + jnp.abs(n(ks[11], (NUM_FILTERS2,))),
      'fc1_w': n(ks[12], (OUTPUT_FC1, FC1_IN)),
      'fc1_b': n(ks[13], (OUTPUT_FC1,)),
      'lstm_wih': n(ks[14], (4 * HIDDEN_LSTM, OUTPUT_FC1)),
      'lstm_whh': n(ks[15], (4 * HIDDEN_LSTM, HIDDEN_LSTM)),
      'lstm_bih': n(ks[16], (4 * HIDDEN_LSTM,)),
      'lstm_bhh': n(ks[17], (4 * HIDDEN_LSTM,)),
      'fc2_w': n(ks[18], (OUTPUT_FC2, HIDDEN_LSTM)),
      'fc2_b': n(ks[19], (OUTPUT_FC2,)),
  }
  k_a, k_b = jax.random.split(ks[19])
  p['fcOut_w'] = (0.1 * jax.random.normal(k_a, (1, OUTPUT_FC2))).astype(jnp.float32)
  p['fcOut_b'] = (0.1 * jax.random.normal(k_b, (1,))).astype(jnp.float32)
  return p


if __name__ == "__main__":
  key = jax.random.PRNGKey(0)
  kp, k1, k2 = jax.random.split(key, 3)
  params = init_params(kp)
  prepared = prepare_params(params, BATCH_SIZE)        # one-time, outside jit

  x1 = jax.random.normal(k1, (BATCH_SIZE, IN_CHANNELS, IN_H, IN_W), jnp.float32)
  x2 = jax.random.normal(k2, (BATCH_SIZE, IN_CHANNELS, IN_H, IN_W), jnp.float32)

  out = jax.block_until_ready(vrkinnn_forward(prepared, x1, x2))
  # final `.to(torch.float64)` — done on host; TPU has no native f64
  out64 = np.asarray(out, dtype=np.float64)
  assert out64.shape == (BATCH_SIZE, 1) and out64.dtype == np.float64
  assert np.all(np.isfinite(out64))
  print("KERNEL_OK")
</pallas_src>

<mosaic_0001>
module attributes {stable_mosaic.version = 11 : i64} {
  func.func @_vrkinnn_kernel(%arg0: memref<128x512xbf16, #tpu.memory_space<vmem>>, %arg1: memref<4x4x128xbf16, #tpu.memory_space<vmem>>, %arg2: memref<4x4x1xf32, #tpu.memory_space<vmem>>, %arg3: memref<4x256x72xbf16, #tpu.memory_space<vmem>>, %arg4: memref<1x72xf32, #tpu.memory_space<vmem>>, %arg5: memref<72x32xf32, #tpu.memory_space<vmem>>, %arg6: memref<1x32xf32, #tpu.memory_space<vmem>>, %arg7: memref<64x128xf32, #tpu.memory_space<vmem>>, %arg8: memref<1x128xf32, #tpu.memory_space<vmem>>, %arg9: memref<32x16xf32, #tpu.memory_space<vmem>>, %arg10: memref<1x16xf32, #tpu.memory_space<vmem>>, %arg11: memref<1x16xf32, #tpu.memory_space<vmem>>, %arg12: memref<1x1xf32, #tpu.memory_space<vmem>>, %arg13: memref<2x1xf32, #tpu.memory_space<vmem>>) attributes {dimension_semantics = [], scalar_prefetch = 0 : i64, scratch_operands = 0 : i64, tpu.core_type = #tpu.core_type<tc>} {
    %c0 = arith.constant 0 : index
    %c0_0 = arith.constant 0 : index
    %0 = vector.load %arg0[%c0, %c0_0] : memref<128x512xbf16, #tpu.memory_space<vmem>>, vector<128x512xbf16>
    %cst = arith.constant 0.000000e+00 : f32
    %1 = vector.broadcast %cst : f32 to vector<4x72xf32>
    %c0_1 = arith.constant 0 : index
    %c0_2 = arith.constant 0 : index
    %c0_3 = arith.constant 0 : index
    %2 = vector.load %arg1[%c0_1, %c0_2, %c0_3] : memref<4x4x128xbf16, #tpu.memory_space<vmem>>, vector<1x4x128xbf16>
    %3 = vector.shape_cast %2 : vector<1x4x128xbf16> to vector<4x128xbf16>
    %cst_4 = arith.constant dense<0.000000e+00> : vector<4x512xf32>
    %4 = tpu.matmul %3, %0, %cst_4 {dimension_numbers = #tpu.dot_dimension_numbers<[1], [0], [0], [1], [0, 0, 1, 1], [], []>} : vector<4x128xbf16>, vector<128x512xbf16>, vector<4x512xf32> -> vector<4x512xf32>
    %c0_5 = arith.constant 0 : index
    %c0_6 = arith.constant 0 : index
    %c0_7 = arith.constant 0 : index
    %5 = vector.load %arg2[%c0_5, %c0_6, %c0_7] : memref<4x4x1xf32, #tpu.memory_space<vmem>>, vector<1x4x1xf32>
    %6 = vector.shape_cast %5 : vector<1x4x1xf32> to vector<4x1xf32>
    %7 = vector.broadcast %6 : vector<4x1xf32> to vector<4x512xf32>
    %8 = arith.addf %4, %7 : vector<4x512xf32>
    %cst_8 = arith.constant 0.000000e+00 : f32
    %9 = vector.broadcast %cst_8 : f32 to vector<4x512xf32>
    %10 = arith.maximumf %8, %9 : vector<4x512xf32>
    %11 = vector.extract_strided_slice %10 {offsets = [0, 0], sizes = [4, 256], strides = [1, 1]} : vector<4x512xf32> to vector<4x256xf32>
    %12 = vector.extract_strided_slice %10 {offsets = [0, 256], sizes = [4, 256], strides = [1, 1]} : vector<4x512xf32> to vector<4x256xf32>
    %13 = arith.maximumf %11, %12 : vector<4x256xf32>
    %14 = arith.truncf %13 : vector<4x256xf32> to vector<4x256xbf16>
    %c0_9 = arith.constant 0 : index
    %c0_10 = arith.constant 0 : index
    %c0_11 = arith.constant 0 : index
    %15 = vector.load %arg3[%c0_9, %c0_10, %c0_11] : memref<4x256x72xbf16, #tpu.memory_space<vmem>>, vector<1x256x72xbf16>
    %16 = vector.shape_cast %15 : vector<1x256x72xbf16> to vector<256x72xbf16>
    %cst_12 = arith.constant dense<0.000000e+00> : vector<4x72xf32>
    %17 = tpu.matmul %14, %16, %cst_12 {dimension_numbers = #tpu.dot_dimension_numbers<[1], [0], [0], [1], [0, 0, 1, 1], [], []>} : vector<4x256xbf16>, vector<256x72xbf16>, vector<4x72xf32> -> vector<4x72xf32>
    %18 = arith.addf %1, %17 : vector<4x72xf32>
    %c1 = arith.constant 1 : index
    %c0_13 = arith.constant 0 : index
    %c0_14 = arith.constant 0 : index
    %19 = vector.load %arg1[%c1, %c0_13, %c0_14] : memref<4x4x128xbf16, #tpu.memory_space<vmem>>, vector<1x4x128xbf16>
    %20 = vector.shape_cast %19 : vector<1x4x128xbf16> to vector<4x128xbf16>
    %cst_15 = arith.constant dense<0.000000e+00> : vector<4x512xf32>
    %21 = tpu.matmul %20, %0, %cst_15 {dimension_numbers = #tpu.dot_dimension_numbers<[1], [0], [0], [1], [0, 0, 1, 1], [], []>} : vector<4x128xbf16>, vector<128x512xbf16>, vector<4x512xf32> -> vector<4x512xf32>
    %c1_16 = arith.constant 1 : index
    %c0_17 = arith.constant 0 : index
    %c0_18 = arith.constant 0 : index
    %22 = vector.load %arg2[%c1_16, %c0_17, %c0_18] : memref<4x4x1xf32, #tpu.memory_space<vmem>>, vector<1x4x1xf32>
    %23 = vector.shape_cast %22 : vector<1x4x1xf32> to vector<4x1xf32>
    %24 = vector.broadcast %23 : vector<4x1xf32> to vector<4x512xf32>
    %25 = arith.addf %21, %24 : vector<4x512xf32>
    %cst_19 = arith.constant 0.000000e+00 : f32
    %26 = vector.broadcast %cst_19 : f32 to vector<4x512xf32>
    %27 = arith.maximumf %25, %26 : vector<4x512xf32>
    %28 = vector.extract_strided_slice %27 {offsets = [0, 0], sizes = [4, 256], strides = [1, 1]} : vector<4x512xf32> to vector<4x256xf32>
    %29 = vector.extract_strided_slice %27 {offsets = [0, 256], sizes = [4, 256], strides = [1, 1]} : vector<4x512xf32> to vector<4x256xf32>
    %30 = arith.maximumf %28, %29 : vector<4x256xf32>
    %31 = arith.truncf %30 : vector<4x256xf32> to vector<4x256xbf16>
    %c1_20 = arith.constant 1 : index
    %c0_21 = arith.constant 0 : index
    %c0_22 = arith.constant 0 : index
    %32 = vector.load %arg3[%c1_20, %c0_21, %c0_22] : memref<4x256x72xbf16, #tpu.memory_space<vmem>>, vector<1x256x72xbf16>
    %33 = vector.shape_cast %32 : vector<1x256x72xbf16> to vector<256x72xbf16>
    %cst_23 = arith.constant dense<0.000000e+00> : vector<4x72xf32>
    %34 = tpu.matmul %31, %33, %cst_23 {dimension_numbers = #tpu.dot_dimension_numbers<[1], [0], [0], [1], [0, 0, 1, 1], [], []>} : vector<4x256xbf16>, vector<256x72xbf16>, vector<4x72xf32> -> vector<4x72xf32>
    %35 = arith.addf %18, %34 : vector<4x72xf32>
    %c2 = arith.constant 2 : index
    %c0_24 = arith.constant 0 : index
    %c0_25 = arith.constant 0 : index
    %36 = vector.load %arg1[%c2, %c0_24, %c0_25] : memref<4x4x128xbf16, #tpu.memory_space<vmem>>, vector<1x4x128xbf16>
    %37 = vector.shape_cast %36 : vector<1x4x128xbf16> to vector<4x128xbf16>
    %cst_26 = arith.constant dense<0.000000e+00> : vector<4x512xf32>
    %38 = tpu.matmul %37, %0, %cst_26 {dimension_numbers = #tpu.dot_dimension_numbers<[1], [0], [0], [1], [0, 0, 1, 1], [], []>} : vector<4x128xbf16>, vector<128x512xbf16>, vector<4x512xf32> -> vector<4x512xf32>
    %c2_27 = arith.constant 2 : index
    %c0_28 = arith.constant 0 : index
    %c0_29 = arith.constant 0 : index
    %39 = vector.load %arg2[%c2_27, %c0_28, %c0_29] : memref<4x4x1xf32, #tpu.memory_space<vmem>>, vector<1x4x1xf32>
    %40 = vector.shape_cast %39 : vector<1x4x1xf32> to vector<4x1xf32>
    %41 = vector.broadcast %40 : vector<4x1xf32> to vector<4x512xf32>
    %42 = arith.addf %38, %41 : vector<4x512xf32>
    %cst_30 = arith.constant 0.000000e+00 : f32
    %43 = vector.broadcast %cst_30 : f32 to vector<4x512xf32>
    %44 = arith.maximumf %42, %43 : vector<4x512xf32>
    %45 = vector.extract_strided_slice %44 {offsets = [0, 0], sizes = [4, 256], strides = [1, 1]} : vector<4x512xf32> to vector<4x256xf32>
    %46 = vector.extract_strided_slice %44 {offsets = [0, 256], sizes = [4, 256], strides = [1, 1]} : vector<4x512xf32> to vector<4x256xf32>
    %47 = arith.maximumf %45, %46 : vector<4x256xf32>
    %48 = arith.truncf %47 : vector<4x256xf32> to vector<4x256xbf16>
    %c2_31 = arith.constant 2 : index
    %c0_32 = arith.constant 0 : index
    %c0_33 = arith.constant 0 : index
    %49 = vector.load %arg3[%c2_31, %c0_32, %c0_33] : memref<4x256x72xbf16, #tpu.memory_space<vmem>>, vector<1x256x72xbf16>
    %50 = vector.shape_cast %49 : vector<1x256x72xbf16> to vector<256x72xbf16>
    %cst_34 = arith.constant dense<0.000000e+00> : vector<4x72xf32>
    %51 = tpu.matmul %48, %50, %cst_34 {dimension_numbers = #tpu.dot_dimension_numbers<[1], [0], [0], [1], [0, 0, 1, 1], [], []>} : vector<4x256xbf16>, vector<256x72xbf16>, vector<4x72xf32> -> vector<4x72xf32>
    %52 = arith.addf %35, %51 : vector<4x72xf32>
    %c3 = arith.constant 3 : index
    %c0_35 = arith.constant 0 : index
    %c0_36 = arith.constant 0 : index
    %53 = vector.load %arg1[%c3, %c0_35, %c0_36] : memref<4x4x128xbf16, #tpu.memory_space<vmem>>, vector<1x4x128xbf16>
    %54 = vector.shape_cast %53 : vector<1x4x128xbf16> to vector<4x128xbf16>
    %cst_37 = arith.constant dense<0.000000e+00> : vector<4x512xf32>
    %55 = tpu.matmul %54, %0, %cst_37 {dimension_numbers = #tpu.dot_dimension_numbers<[1], [0], [0], [1], [0, 0, 1, 1], [], []>} : vector<4x128xbf16>, vector<128x512xbf16>, vector<4x512xf32> -> vector<4x512xf32>
    %c3_38 = arith.constant 3 : index
    %c0_39 = arith.constant 0 : index
    %c0_40 = arith.constant 0 : index
    %56 = vector.load %arg2[%c3_38, %c0_39, %c0_40] : memref<4x4x1xf32, #tpu.memory_space<vmem>>, vector<1x4x1xf32>
    %57 = vector.shape_cast %56 : vector<1x4x1xf32> to vector<4x1xf32>
    %58 = vector.broadcast %57 : vector<4x1xf32> to vector<4x512xf32>
    %59 = arith.addf %55, %58 : vector<4x512xf32>
    %cst_41 = arith.constant 0.000000e+00 : f32
    %60 = vector.broadcast %cst_41 : f32 to vector<4x512xf32>
    %61 = arith.maximumf %59, %60 : vector<4x512xf32>
    %62 = vector.extract_strided_slice %61 {offsets = [0, 0], sizes = [4, 256], strides = [1, 1]} : vector<4x512xf32> to vector<4x256xf32>
    %63 = vector.extract_strided_slice %61 {offsets = [0, 256], sizes = [4, 256], strides = [1, 1]} : vector<4x512xf32> to vector<4x256xf32>
    %64 = arith.maximumf %62, %63 : vector<4x256xf32>
    %65 = arith.truncf %64 : vector<4x256xf32> to vector<4x256xbf16>
    %c3_42 = arith.constant 3 : index
    %c0_43 = arith.constant 0 : index
    %c0_44 = arith.constant 0 : index
    %66 = vector.load %arg3[%c3_42, %c0_43, %c0_44] : memref<4x256x72xbf16, #tpu.memory_space<vmem>>, vector<1x256x72xbf16>
    %67 = vector.shape_cast %66 : vector<1x256x72xbf16> to vector<256x72xbf16>
    %cst_45 = arith.constant dense<0.000000e+00> : vector<4x72xf32>
    %68 = tpu.matmul %65, %67, %cst_45 {dimension_numbers = #tpu.dot_dimension_numbers<[1], [0], [0], [1], [0, 0, 1, 1], [], []>} : vector<4x256xbf16>, vector<256x72xbf16>, vector<4x72xf32> -> vector<4x72xf32>
    %69 = arith.addf %52, %68 : vector<4x72xf32>
    %c0_46 = arith.constant 0 : index
    %c0_47 = arith.constant 0 : index
    %70 = vector.load %arg4[%c0_46, %c0_47] : memref<1x72xf32, #tpu.memory_space<vmem>>, vector<1x72xf32>
    %71 = vector.broadcast %70 : vector<1x72xf32> to vector<4x72xf32>
    %72 = arith.addf %69, %71 : vector<4x72xf32>
    %cst_48 = arith.constant 0.000000e+00 : f32
    %73 = vector.broadcast %cst_48 : f32 to vector<4x72xf32>
    %74 = arith.maximumf %72, %73 : vector<4x72xf32>
    %c0_49 = arith.constant 0 : index
    %c0_50 = arith.constant 0 : index
    %75 = vector.load %arg5[%c0_49, %c0_50] : memref<72x32xf32, #tpu.memory_space<vmem>>, vector<72x32xf32>
    %cst_51 = arith.constant dense<0.000000e+00> : vector<4x32xf32>
    %76 = tpu.matmul %74, %75, %cst_51 {dimension_numbers = #tpu.dot_dimension_numbers<[1], [0], [0], [1], [0, 0, 1, 1], [], []>} : vector<4x72xf32>, vector<72x32xf32>, vector<4x32xf32> -> vector<4x32xf32>
    %c0_52 = arith.constant 0 : index
    %c0_53 = arith.constant 0 : index
    %77 = vector.load %arg6[%c0_52, %c0_53] : memref<1x32xf32, #tpu.memory_space<vmem>>, vector<1x32xf32>
    %78 = vector.broadcast %77 : vector<1x32xf32> to vector<4x32xf32>
    %79 = arith.addf %76, %78 : vector<4x32xf32>
    %c0_54 = arith.constant 0 : index
    %c0_55 = arith.constant 0 : index
    %80 = vector.load %arg7[%c0_54, %c0_55] : memref<64x128xf32, #tpu.memory_space<vmem>>, vector<64x128xf32>
    %c0_56 = arith.constant 0 : index
    %c0_57 = arith.constant 0 : index
    %81 = vector.load %arg8[%c0_56, %c0_57] : memref<1x128xf32, #tpu.memory_space<vmem>>, vector<1x128xf32>
    %c0_58 = arith.constant 0 : index
    %c0_59 = arith.constant 0 : index
    %82 = vector.load %arg9[%c0_58, %c0_59] : memref<32x16xf32, #tpu.memory_space<vmem>>, vector<32x16xf32>
    %c0_60 = arith.constant 0 : index
    %c0_61 = arith.constant 0 : index
    %83 = vector.load %arg10[%c0_60, %c0_61] : memref<1x16xf32, #tpu.memory_space<vmem>>, vector<1x16xf32>
    %84 = tpu.iota {dimensions = array<i32: 0>} : vector<2x16xi32>
    %c0_i32 = arith.constant 0 : i32
    %85 = vector.broadcast %c0_i32 : i32 to vector<2x16xi32>
    %86 = arith.cmpi eq, %84, %85 : vector<2x16xi32>
    %cst_62 = arith.constant 1.000000e+00 : f32
    %cst_63 = arith.constant -1.000000e+00 : f32
    %87 = vector.broadcast %cst_62 : f32 to vector<2x16xf32>
    %88 = vector.broadcast %cst_63 : f32 to vector<2x16xf32>
    %89 = arith.select %86, %87, %88 : vector<2x16xi1>, vector<2x16xf32>
    %90 = vector.extract_strided_slice %79 {offsets = [0, 0], sizes = [2, 32], strides = [1, 1]} : vector<4x32xf32> to vector<2x32xf32>
    %91 = vector.extract_strided_slice %80 {offsets = [0, 0], sizes = [32, 128], strides = [1, 1]} : vector<64x128xf32> to vector<32x128xf32>
    %cst_64 = arith.constant dense<0.000000e+00> : vector<2x128xf32>
    %92 = tpu.matmul %90, %91, %cst_64 {dimension_numbers = #tpu.dot_dimension_numbers<[1], [0], [0], [1], [0, 0, 1, 1], [], []>} : vector<2x32xf32>, vector<32x128xf32>, vector<2x128xf32> -> vector<2x128xf32>
    %93 = vector.broadcast %81 : vector<1x128xf32> to vector<2x128xf32>
    %94 = arith.addf %92, %93 : vector<2x128xf32>
    %95 = arith.negf %94 : vector<2x128xf32>
    %96 = math.exp %95 : vector<2x128xf32>
    %cst_65 = arith.constant 1.000000e+00 : f32
    %97 = vector.broadcast %cst_65 : f32 to vector<2x128xf32>
    %98 = arith.addf %97, %96 : vector<2x128xf32>
    %99 = arith.divf %97, %98 : vector<2x128xf32>
    %100 = math.tanh %94 : vector<2x128xf32>
    %101 = vector.extract_strided_slice %99 {offsets = [0, 0], sizes = [2, 32], strides = [1, 1]} : vector<2x128xf32> to vector<2x32xf32>
    %102 = vector.extract_strided_slice %100 {offsets = [0, 64], sizes = [2, 32], strides = [1, 1]} : vector<2x128xf32> to vector<2x32xf32>
    %103 = vector.extract_strided_slice %99 {offsets = [0, 96], sizes = [2, 32], strides = [1, 1]} : vector<2x128xf32> to vector<2x32xf32>
    %104 = arith.mulf %101, %102 : vector<2x32xf32>
    %105 = math.tanh %104 : vector<2x32xf32>
    %106 = arith.mulf %103, %105 : vector<2x32xf32>
    %cst_66 = arith.constant dense<0.000000e+00> : vector<2x16xf32>
    %107 = tpu.matmul %106, %82, %cst_66 {dimension_numbers = #tpu.dot_dimension_numbers<[1], [0], [0], [1], [0, 0, 1, 1], [], []>} : vector<2x32xf32>, vector<32x16xf32>, vector<2x16xf32> -> vector<2x16xf32>
    %108 = vector.broadcast %83 : vector<1x16xf32> to vector<2x16xf32>
    %109 = arith.addf %107, %108 : vector<2x16xf32>
    %110 = arith.mulf %109, %89 : vector<2x16xf32>
    %cst_67 = arith.constant dense<0.000000e+00> : vector<16xf32>
    %111 = vector.multi_reduction <add>, %110, %cst_67 [0] : vector<2x16xf32> to vector<16xf32>
    %112 = vector.shape_cast %111 : vector<16xf32> to vector<1x16xf32>
    %113 = math.absf %112 : vector<1x16xf32>
    %114 = vector.extract_strided_slice %79 {offsets = [2, 0], sizes = [2, 32], strides = [1, 1]} : vector<4x32xf32> to vector<2x32xf32>
    %115 = tpu.concatenate %114, %106 in 1 : vector<2x32xf32>, vector<2x32xf32> -> vector<2x64xf32>
    %cst_68 = arith.constant dense<0.000000e+00> : vector<2x128xf32>
    %116 = tpu.matmul %115, %80, %cst_68 {dimension_numbers = #tpu.dot_dimension_numbers<[1], [0], [0], [1], [0, 0, 1, 1], [], []>} : vector<2x64xf32>, vector<64x128xf32>, vector<2x128xf32> -> vector<2x128xf32>
    %117 = vector.broadcast %81 : vector<1x128xf32> to vector<2x128xf32>
    %118 = arith.addf %116, %117 : vector<2x128xf32>
    %119 = arith.negf %118 : vector<2x128xf32>
    %120 = math.exp %119 : vector<2x128xf32>
    %cst_69 = arith.constant 1.000000e+00 : f32
    %121 = vector.broadcast %cst_69 : f32 to vector<2x128xf32>
    %122 = arith.addf %121, %120 : vector<2x128xf32>
    %123 = arith.divf %121, %122 : vector<2x128xf32>
    %124 = math.tanh %118 : vector<2x128xf32>
    %125 = vector.extract_strided_slice %123 {offsets = [0, 0], sizes = [2, 32], strides = [1, 1]} : vector<2x128xf32> to vector<2x32xf32>
    %126 = vector.extract_strided_slice %123 {offsets = [0, 32], sizes = [2, 32], strides = [1, 1]} : vector<2x128xf32> to vector<2x32xf32>
    %127 = vector.extract_strided_slice %124 {offsets = [0, 64], sizes = [2, 32], strides = [1, 1]} : vector<2x128xf32> to vector<2x32xf32>
    %128 = vector.extract_strided_slice %123 {offsets = [0, 96], sizes = [2, 32], strides = [1, 1]} : vector<2x128xf32> to vector<2x32xf32>
    %129 = arith.mulf %126, %104 : vector<2x32xf32>
    %130 = arith.mulf %125, %127 : vector<2x32xf32>
    %131 = arith.addf %129, %130 : vector<2x32xf32>
    %132 = math.tanh %131 : vector<2x32xf32>
    %133 = arith.mulf %128, %132 : vector<2x32xf32>
    %cst_70 = arith.constant dense<0.000000e+00> : vector<2x16xf32>
    %134 = tpu.matmul %133, %82, %cst_70 {dimension_numbers = #tpu.dot_dimension_numbers<[1], [0], [0], [1], [0, 0, 1, 1], [], []>} : vector<2x32xf32>, vector<32x16xf32>, vector<2x16xf32> -> vector<2x16xf32>
    %135 = vector.broadcast %83 : vector<1x16xf32> to vector<2x16xf32>
    %136 = arith.addf %134, %135 : vector<2x16xf32>
    %137 = arith.mulf %136, %89 : vector<2x16xf32>
    %cst_71 = arith.constant dense<0.000000e+00> : vector<16xf32>
    %138 = vector.multi_reduction <add>, %137, %cst_71 [0] : vector<2x16xf32> to vector<16xf32>
    %139 = vector.shape_cast %138 : vector<16xf32> to vector<1x16xf32>
    %140 = math.absf %139 : vector<1x16xf32>
    %141 = tpu.concatenate %113, %140 in 0 : vector<1x16xf32>, vector<1x16xf32> -> vector<2x16xf32>
    %c0_72 = arith.constant 0 : index
    %c0_73 = arith.constant 0 : index
    %142 = vector.load %arg11[%c0_72, %c0_73] : memref<1x16xf32, #tpu.memory_space<vmem>>, vector<1x16xf32>
    %143 = vector.broadcast %142 : vector<1x16xf32> to vector<2x16xf32>
    %144 = arith.mulf %141, %143 : vector<2x16xf32>
    %cst_74 = arith.constant dense<0.000000e+00> : vector<2xf32>
    %145 = vector.multi_reduction <add>, %144, %cst_74 [1] : vector<2x16xf32> to vector<2xf32>
    %146 = vector.shape_cast %145 : vector<2xf32> to vector<2x1xf32>
    %c0_75 = arith.constant 0 : index
    %c0_76 = arith.constant 0 : index
    %147 = vector.load %arg12[%c0_75, %c0_76] : memref<1x1xf32, #tpu.memory_space<vmem>>, vector<1x1xf32>
    %148 = vector.broadcast %147 : vector<1x1xf32> to vector<2x1xf32>
    %149 = arith.addf %146, %148 : vector<2x1xf32>
    %150 = arith.negf %149 : vector<2x1xf32>
    %151 = math.exp %150 : vector<2x1xf32>
    %cst_77 = arith.constant 1.000000e+00 : f32
    %152 = vector.broadcast %cst_77 : f32 to vector<2x1xf32>
    %153 = arith.addf %152, %151 : vector<2x1xf32>
    %154 = arith.divf %152, %153 : vector<2x1xf32>
    %c0_78 = arith.constant 0 : index
    %c0_79 = arith.constant 0 : index
    %155 = vector.load %arg13[%c0_78, %c0_79] : memref<2x1xf32, #tpu.memory_space<vmem>>, vector<2x1xf32>
    tpu.vector_store %arg13[%c0_78, %c0_79], %154 {strides = array<i32>} : memref<2x1xf32, #tpu.memory_space<vmem>>, vector<2x1xf32>,
    return
  }
}

</mosaic_0001>

<llo_original>
// kernel: vrkinnn_forward.1
$region0: #{vrkinnn_forward.1}
  #allocation0 [shape = 'u32[]', space=smem, size = 0x4, offset = 0x4, fixed_abs, tag = 'smem constant byte address 0x4 - core index']
  #allocation1 [shape = 'u32[144,128]{1,0:T(1,128)}', space=vmem, size = 0x12000, scoped, tag = 'internal scratch']
  #allocation2 [shape = 'f32[1,1]{1,0:T(1,128)S(1)}', space=vmem, size = 0x200, scoped, tag = 'scoped memory for vrkinnn_forward.1']
  %s0 = inlined_call_operand.vmem [shape: bf16[128,512], index: 0, kind: input, shape index: {}]
  %s1 = inlined_call_operand.vmem [shape: bf16[4,4,128], index: 1, kind: input, shape index: {}]
  %s2 = inlined_call_operand.vmem [shape: f32[4,4,1], index: 2, kind: input, shape index: {}]
  %s3 = inlined_call_operand.vmem [shape: bf16[4,256,72], index: 3, kind: input, shape index: {}]
  %s4 = inlined_call_operand.vmem [shape: f32[1,72], index: 4, kind: input, shape index: {}]
  %s5 = inlined_call_operand.vmem [shape: f32[72,32], index: 5, kind: input, shape index: {}]
  %s6 = inlined_call_operand.vmem [shape: f32[1,32], index: 6, kind: input, shape index: {}]
  %s7 = inlined_call_operand.vmem [shape: f32[64,128], index: 7, kind: input, shape index: {}]
  %s8 = inlined_call_operand.vmem [shape: f32[1,128], index: 8, kind: input, shape index: {}]
  %s9 = inlined_call_operand.vmem [shape: f32[32,16], index: 9, kind: input, shape index: {}]
  %s10 = inlined_call_operand.vmem [shape: f32[1,16], index: 10, kind: input, shape index: {}]
  %s11 = inlined_call_operand.vmem [shape: f32[1,16], index: 11, kind: input, shape index: {}]
  %s12 = inlined_call_operand.<no memory space> [shape: f32[1,1], index: 12, kind: input, shape index: {}]
  %s13 = inlined_call_operand.vmem [shape: f32[2,1], index: 13, kind: output, shape index: {}]
  %s14 = sld [smem:[#allocation0]]
  $region62: #{vrkinnn_forward.1} parent=0
    _
  %s16 = ssub.s32 1, %s14
  %s17 = scalar_select 0, %s16, %s14
  %v18 = vstv %s12
  %19 = vst [vmem:[#allocation2] sm:$0x1] %v18
  // Predicated region
  $region2: #{vrkinnn_forward.1} parent=0 // pred_check
    _
  $region3: #{vrkinnn_forward.1} parent=0 // pred_check_branch
    %21 = sbr.rel (0) target = $region5
  $region4: #{vrkinnn_forward.1} parent=0 // pred_region
    _
  $region5: #{vrkinnn_forward.1} parent=0 // pred_fallthru
    _
  // Predicated region
  $region6: #{vrkinnn_forward.1} parent=0 // pred_check
    _
  $region7: #{vrkinnn_forward.1} parent=0 // pred_check_branch
    %23 = sbr.rel (0) target = $region9
  $region8: #{vrkinnn_forward.1} parent=0 // pred_region
    _
  $region9: #{vrkinnn_forward.1} parent=0 // pred_fallthru
    _
  // Predicated region
  $region10: #{vrkinnn_forward.1} parent=0 // pred_check
    _
  $region11: #{vrkinnn_forward.1} parent=0 // pred_check_branch
    %25 = sbr.rel (0) target = $region13
  $region12: #{vrkinnn_forward.1} parent=0 // pred_region
    _
  $region13: #{vrkinnn_forward.1} parent=0 // pred_fallthru
    _
  // Predicated region
  $region14: #{vrkinnn_forward.1} parent=0 // pred_check
    _
  $region15: #{vrkinnn_forward.1} parent=0 // pred_check_branch
    %27 = sbr.rel (0) target = $region17
  $region16: #{vrkinnn_forward.1} parent=0 // pred_region
    _
  $region17: #{vrkinnn_forward.1} parent=0 // pred_fallthru
    _
  // Predicated region
  $region18: #{vrkinnn_forward.1} parent=0 // pred_check
    _
  $region19: #{vrkinnn_forward.1} parent=0 // pred_check_branch
    %29 = sbr.rel (0) target = $region21
  $region20: #{vrkinnn_forward.1} parent=0 // pred_region
    _
  $region21: #{vrkinnn_forward.1} parent=0 // pred_fallthru
    _
  // Predicated region
  $region22: #{vrkinnn_forward.1} parent=0 // pred_check
    _
  $region23: #{vrkinnn_forward.1} parent=0 // pred_check_branch
    %31 = sbr.rel (0) target = $region25
  $region24: #{vrkinnn_forward.1} parent=0 // pred_region
    _
  $region25: #{vrkinnn_forward.1} parent=0 // pred_fallthru
    _
  // Predicated region
  $region26: #{vrkinnn_forward.1} parent=0 // pred_check
    _
  $region27: #{vrkinnn_forward.1} parent=0 // pred_check_branch
    %33 = sbr.rel (0) target = $region29
  $region28: #{vrkinnn_forward.1} parent=0 // pred_region
    _
  $region29: #{vrkinnn_forward.1} parent=0 // pred_fallthru
    _
  // Predicated region
  $region30: #{vrkinnn_forward.1} parent=0 // pred_check
    _
  $region31: #{vrkinnn_forward.1} parent=0 // pred_check_branch
    %35 = sbr.rel (0) target = $region33
  $region32: #{vrkinnn_forward.1} parent=0 // pred_region
    _
  $region33: #{vrkinnn_forward.1} parent=0 // pred_fallthru
    _
  // Predicated region
  $region34: #{vrkinnn_forward.1} parent=0 // pred_check
    _
  $region35: #{vrkinnn_forward.1} parent=0 // pred_check_branch
    %37 = sbr.rel (0) target = $region37
  $region36: #{vrkinnn_forward.1} parent=0 // pred_region
    _
  $region37: #{vrkinnn_forward.1} parent=0 // pred_fallthru
    _
  // Predicated region
  $region38: #{vrkinnn_forward.1} parent=0 // pred_check
    _
  $region39: #{vrkinnn_forward.1} parent=0 // pred_check_branch
    %39 = sbr.rel (0) target = $region41
  $region40: #{vrkinnn_forward.1} parent=0 // pred_region
    _
  $region41: #{vrkinnn_forward.1} parent=0 // pred_fallthru
    _
  // Predicated region
  $region42: #{vrkinnn_forward.1} parent=0 // pred_check
    _
  $region43: #{vrkinnn_forward.1} parent=0 // pred_check_branch
    %41 = sbr.rel (0) target = $region45
  $region44: #{vrkinnn_forward.1} parent=0 // pred_region
    _
  $region45: #{vrkinnn_forward.1} parent=0 // pred_fallthru
    _
  // Predicated region
  $region46: #{vrkinnn_forward.1} parent=0 // pred_check
    _
  $region47: #{vrkinnn_forward.1} parent=0 // pred_check_branch
    %43 = sbr.rel (0) target = $region49
  $region48: #{vrkinnn_forward.1} parent=0 // pred_region
    _
  $region49: #{vrkinnn_forward.1} parent=0 // pred_fallthru
    _
  // Predicated region
  $region50: #{vrkinnn_forward.1} parent=0 // pred_check
    _
  $region51: #{vrkinnn_forward.1} parent=0 // pred_check_branch
    %45 = sbr.rel (0) target = $region53
  $region52: #{vrkinnn_forward.1} parent=0 // pred_region
    _
  $region53: #{vrkinnn_forward.1} parent=0 // pred_fallthru
    _
  %v47 = vld [vmem:[%s0] sm:$0xff]
  %v48 = vld [vmem:[%s0 + $0x8] sm:$0xff]
  %v49 = vld [vmem:[%s0 + $0x10] sm:$0xff]
  %v50 = vld [vmem:[%s0 + $0x18] sm:$0xff]
  %v51 = vld [vmem:[%s0 + $0x20] sm:$0xff]
  %v52 = vld [vmem:[%s0 + $0x28] sm:$0xff]
  %v53 = vld [vmem:[%s0 + $0x30] sm:$0xff]
  %v54 = vld [vmem:[%s0 + $0x38] sm:$0xff]
  %v55 = vld [vmem:[%s0 + $0x40] sm:$0xff]
  %v56 = vld [vmem:[%s0 + $0x48] sm:$0xff]
  %v57 = vld [vmem:[%s0 + $0x50] sm:$0xff]
  %v58 = vld [vmem:[%s0 + $0x58] sm:$0xff]
  %v59 = vld [vmem:[%s0 + $0x60] sm:$0xff]
  %v60 = vld [vmem:[%s0 + $0x68] sm:$0xff]
  %v61 = vld [vmem:[%s0 + $0x70] sm:$0xff]
  %v62 = vld [vmem:[%s0 + $0x78] sm:$0xff]
  %v63 = vld [vmem:[%s0 + $0x80] sm:$0xff]
  %v64 = vld [vmem:[%s0 + $0x88] sm:$0xff]
  %v65 = vld [vmem:[%s0 + $0x90] sm:$0xff]
  %v66 = vld [vmem:[%s0 + $0x98] sm:$0xff]
  %v67 = vld [vmem:[%s0 + $0xa0] sm:$0xff]
  %v68 = vld [vmem:[%s0 + $0xa8] sm:$0xff]
  %v69 = vld [vmem:[%s0 + $0xb0] sm:$0xff]
  %v70 = vld [vmem:[%s0 + $0xb8] sm:$0xff]
  %v71 = vld [vmem:[%s0 + $0xc0] sm:$0xff]
  %v72 = vld [vmem:[%s0 + $0xc8] sm:$0xff]
  %v73 = vld [vmem:[%s0 + $0xd0] sm:$0xff]
  %v74 = vld [vmem:[%s0 + $0xd8] sm:$0xff]
  %v75 = vld [vmem:[%s0 + $0xe0] sm:$0xff]
  %v76 = vld [vmem:[%s0 + $0xe8] sm:$0xff]
  %v77 = vld [vmem:[%s0 + $0xf0] sm:$0xff]
  %v78 = vld [vmem:[%s0 + $0xf8] sm:$0xff]
  %v79 = vld [vmem:[%s1] sm:$0x3]
  %v80 = vld [vmem:[%s2] sm:$0xf]
  %82 = vset.pattern.permute.xlu0 0
  %83 = vperm.xlu0 %82, %v80
  %v84 = vpop.permute.xlu0 %83
  %v118 = vunpack.c.l.b16 %v47
  %v119 = vunpack.c.h.b16 %v47
  %v120 = vunpack.c.l.b16 %v48
  %v121 = vunpack.c.h.b16 %v48
  %v122 = vunpack.c.l.b16 %v49
  %v123 = vunpack.c.h.b16 %v49
  %v124 = vunpack.c.l.b16 %v50
  %v125 = vunpack.c.h.b16 %v50
  %v126 = vunpack.c.l.b16 %v51
  %v127 = vunpack.c.h.b16 %v51
  %v128 = vunpack.c.l.b16 %v52
  %v129 = vunpack.c.h.b16 %v52
  %v130 = vunpack.c.l.b16 %v53
  %v131 = vunpack.c.h.b16 %v53
  %v132 = vunpack.c.l.b16 %v54
  %v133 = vunpack.c.h.b16 %v54
  %v134 = vunpack.c.l.b16 %v55
  %v135 = vunpack.c.h.b16 %v55
  %v136 = vunpack.c.l.b16 %v56
  %v137 = vunpack.c.h.b16 %v56
  %v138 = vunpack.c.l.b16 %v57
  %v139 = vunpack.c.h.b16 %v57
  %v140 = vunpack.c.l.b16 %v58
  %v141 = vunpack.c.h.b16 %v58
  %v142 = vunpack.c.l.b16 %v59
  %v143 = vunpack.c.h.b16 %v59
  %v144 = vunpack.c.l.b16 %v60
  %v145 = vunpack.c.h.b16 %v60
  %v146 = vunpack.c.l.b16 %v61
  %v147 = vunpack.c.h.b16 %v61
  %v148 = vunpack.c.l.b16 %v62
  %v149 = vunpack.c.h.b16 %v62
  %v150 = vunpack.c.l.b16 %v63
  %v151 = vunpack.c.h.b16 %v63
  %v152 = vunpack.c.l.b16 %v64
  %v153 = vunpack.c.h.b16 %v64
  %v154 = vunpack.c.l.b16 %v65
  %v155 = vunpack.c.h.b16 %v65
  %v156 = vunpack.c.l.b16 %v66
  %v157 = vunpack.c.h.b16 %v66
  %v158 = vunpack.c.l.b16 %v67
  %v159 = vunpack.c.h.b16 %v67
  %v160 = vunpack.c.l.b16 %v68
  %v161 = vunpack.c.h.b16 %v68
  %v162 = vunpack.c.l.b16 %v69
  %v163 = vunpack.c.h.b16 %v69
  %v164 = vunpack.c.l.b16 %v70
  %v165 = vunpack.c.h.b16 %v70
  %v166 = vunpack.c.l.b16 %v71
  %v167 = vunpack.c.h.b16 %v71
  %v168 = vunpack.c.l.b16 %v72
  %v169 = vunpack.c.h.b16 %v72
  %v170 = vunpack.c.l.b16 %v73
  %v171 = vunpack.c.h.b16 %v73
  %v172 = vunpack.c.l.b16 %v74
  %v173 = vunpack.c.h.b16 %v74
  %v174 = vunpack.c.l.b16 %v75
  %v175 = vunpack.c.h.b16 %v75
  %v176 = vunpack.c.l.b16 %v76
  %v177 = vunpack.c.h.b16 %v76
  %v178 = vunpack.c.l.b16 %v77
  %v179 = vunpack.c.h.b16 %v77
  %v180 = vunpack.c.l.b16 %v78
  %v181 = vunpack.c.h.b16 %v78
  %v182 = vpack.c.b16 %v122, %v118
  %v183 = vpack.c.b16 %v123, %v119
  %v184 = vpack.c.b16 %v124, %v120
  %v185 = vpack.c.b16 %v125, %v121
  %v186 = vpack.c.b16 %v130, %v126
  %v187 = vpack.c.b16 %v131, %v127
  %v188 = vpack.c.b16 %v132, %v128
  %v189 = vpack.c.b16 %v133, %v129
  %v190 = vpack.c.b16 %v138, %v134
  %v191 = vpack.c.b16 %v139, %v135
  %v192 = vpack.c.b16 %v140, %v136
  %v193 = vpack.c.b16 %v141, %v137
  %v194 = vpack.c.b16 %v146, %v142
  %v195 = vpack.c.b16 %v147, %v143
  %v196 = vpack.c.b16 %v148, %v144
  %v197 = vpack.c.b16 %v149, %v145
  %v198 = vpack.c.b16 %v154, %v150
  %v199 = vpack.c.b16 %v155, %v151
  %v200 = vpack.c.b16 %v156, %v152
  %v201 = vpack.c.b16 %v157, %v153
  %v202 = vpack.c.b16 %v162, %v158
  %v203 = vpack.c.b16 %v163, %v159
  %v204 = vpack.c.b16 %v164, %v160
  %v205 = vpack.c.b16 %v165, %v161
  %v206 = vpack.c.b16 %v170, %v166
  %v207 = vpack.c.b16 %v171, %v167
  %v208 = vpack.c.b16 %v172, %v168
  %v209 = vpack.c.b16 %v173, %v169
  %v210 = vpack.c.b16 %v178, %v174
  %v211 = vpack.c.b16 %v179, %v175
  %v212 = vpack.c.b16 %v180, %v176
  %v213 = vpack.c.b16 %v181, %v177
  %246 = vmatprep.subr.bf16.mxu0 %v183
  %247 = vmatpush1.bf16.msra.mxu0 %v182
  %248 = vmatprep.subr.bf16.mxu0 %v187
  %249 = vmatpush1.bf16.msra.mxu0 %v186
  %250 = vmatprep.subr.bf16.mxu0 %v191
  %251 = vmatpush1.bf16.msra.mxu0 %v190
  %252 = vmatprep.subr.bf16.mxu0 %v195
  %253 = vmatpush1.bf16.msra.mxu0 %v194
  %254 = vmatprep.subr.bf16.mxu0 %v199
  %255 = vmatpush1.bf16.msra.mxu0 %v198
  %256 = vmatprep.subr.bf16.mxu0 %v203
  %257 = vmatpush1.bf16.msra.mxu0 %v202
  %258 = vmatprep.subr.bf16.mxu0 %v207
  %259 = vmatpush1.bf16.msra.mxu0 %v206
  %260 = vmatprep.subr.bf16.mxu0 %v211
  %261 = vmatpush1.bf16.msra.mxu0 %v210
  %262 = vmatprep.subr.bf16.mxu0 0
  %263 = vmatpush1.bf16.msra.mxu0 0
  %264 = vmatprep.subr.bf16.mxu0 0
  %265 = vmatpush1.bf16.msra.mxu0 0
  %266 = vmatprep.subr.bf16.mxu0 0
  %267 = vmatpush1.bf16.msra.mxu0 0
  %268 = vmatprep.subr.bf16.mxu0 0
  %269 = vmatpush1.bf16.msra.mxu0 0
  %270 = vmatprep.subr.bf16.mxu0 0
  %271 = vmatpush1.bf16.msra.mxu0 0
  %272 = vmatprep.subr.bf16.mxu0 0
  %273 = vmatpush1.bf16.msra.mxu0 0
  %274 = vmatprep.subr.bf16.mxu0 0
  %275 = vmatpush1.bf16.msra.mxu0 0
  %276 = vmatprep.subr.bf16.mxu0 0
  %277 = vmatpush1.bf16.msra.mxu0 0
  %278 = vmatprep.mubr.bf16.mxu0 0
  %279 = vmatmul.mubr.bf16.gmra.mrb[0].mxu0 %v79
  %v280 = vpop.f32.mrb[0].mxu0
  %v281 = vadd.f32 %v84, %v280
  %v282 = vpop.f32.mrb[0].mxu0
  %v283 = vadd.f32 %v84, %v282
  %v284 = vpop.f32.mrb[0].mxu0
  %v285 = vpop.f32.mrb[0].mxu0
  %286 = vdwg.mxu0
  %287 = vmatprep.subr.bf16.mxu0 %v185
  %288 = vmatpush1.bf16.msra.mxu0 %v184
  %289 = vmatprep.subr.bf16.mxu0 %v189
  %290 = vmatpush1.bf16.msra.mxu0 %v188
  %291 = vmatprep.subr.bf16.mxu0 %v193
  %292 = vmatpush1.bf16.msra.mxu0 %v192
  %293 = vmatprep.subr.bf16.mxu0 %v197
  %294 = vmatpush1.bf16.msra.mxu0 %v196
  %295 = vmatprep.subr.bf16.mxu0 %v201
  %296 = vmatpush1.bf16.msra.mxu0 %v200
  %297 = vmatprep.subr.bf16.mxu0 %v205
  %298 = vmatpush1.bf16.msra.mxu0 %v204
  %299 = vmatprep.subr.bf16.mxu0 %v209
  %300 = vmatpush1.bf16.msra.mxu0 %v208
  %301 = vmatprep.subr.bf16.mxu0 %v213
  %302 = vmatpush1.bf16.msra.mxu0 %v212
  %303 = vmatprep.subr.bf16.mxu0 0
  %304 = vmatpush1.bf16.msra.mxu0 0
  %305 = vmatprep.subr.bf16.mxu0 0
  %306 = vmatpush1.bf16.msra.mxu0 0
  %307 = vmatprep.subr.bf16.mxu0 0
  %308 = vmatpush1.bf16.msra.mxu0 0
  %309 = vmatprep.subr.bf16.mxu0 0
  %310 = vmatpush1.bf16.msra.mxu0 0
  %311 = vmatprep.subr.bf16.mxu0 0
  %312 = vmatpush1.bf16.msra.mxu0 0
  %313 = vmatprep.subr.bf16.mxu0 0
  %314 = vmatpush1.bf16.msra.mxu0 0
  %315 = vmatprep.subr.bf16.mxu0 0
  %316 = vmatpush1.bf16.msra.mxu0 0
  %317 = vmatprep.subr.bf16.mxu0 0
  %318 = vmatpush1.bf16.msra.mxu0 0
  %319 = vmatprep.mubr.bf16.mxu0 0
  %320 = vmatmul.mubr.bf16.gmra.mrb[0].mxu0 %v79
  %v321 = vpop.f32.mrb[0].mxu0
  %v322 = vadd.f32 %v84, %v321
  %v323 = vpop.f32.mrb[0].mxu0
  %v324 = vadd.f32 %v84, %v323
  %v325 = vpop.f32.mrb[0].mxu0
  %v326 = vpop.f32.mrb[0].mxu0
  %327 = vdwg.mxu0
  %v328 = vmax.f32 %v281, 0.0
  %v329 = vmax.f32 %v283, 0.0
  %v330 = vmax.f32 %v322, 0.0
  %v331 = vmax.f32 %v324, 0.0
  %v332 = vmax.f32 %v328, %v330
  %v333 = vmax.f32 %v329, %v331
  %v334 = vpack.c.bf16 %v332, %v332
  %v335 = vpack.c.bf16 %v333, %v333
  %v336 = vld [vmem:[%s3] sm:$0xf]
  %v337 = vld [vmem:[%s3 + $0x4] sm:$0xf]
  %v338 = vld [vmem:[%s3 + $0x8] sm:$0xf]
  %v339 = vld [vmem:[%s3 + $0xc] sm:$0xf]
  %v340 = vld [vmem:[%s3 + $0x10] sm:$0xf]
  %v341 = vld [vmem:[%s3 + $0x14] sm:$0xf]
  %v342 = vld [vmem:[%s3 + $0x18] sm:$0xf]
  %v343 = vld [vmem:[%s3 + $0x1c] sm:$0xf]
  %v344 = vld [vmem:[%s3 + $0x20] sm:$0xf]
  %v345 = vld [vmem:[%s3 + $0x24] sm:$0xf]
  %v346 = vld [vmem:[%s3 + $0x28] sm:$0xf]
  %v347 = vld [vmem:[%s3 + $0x2c] sm:$0xf]
  %v348 = vld [vmem:[%s3 + $0x30] sm:$0xf]
  %v349 = vld [vmem:[%s3 + $0x34] sm:$0xf]
  %v350 = vld [vmem:[%s3 + $0x38] sm:$0xf]
  %v351 = vld [vmem:[%s3 + $0x3c] sm:$0xf]
  %v352 = vld [vmem:[%s3 + $0x40] sm:$0xf]
  %v353 = vld [vmem:[%s3 + $0x44] sm:$0xf]
  %v354 = vld [vmem:[%s3 + $0x48] sm:$0xf]
  %v355 = vld [vmem:[%s3 + $0x4c] sm:$0xf]
  %v356 = vld [vmem:[%s3 + $0x50] sm:$0xf]
  %v357 = vld [vmem:[%s3 + $0x54] sm:$0xf]
  %v358 = vld [vmem:[%s3 + $0x58] sm:$0xf]
  %v359 = vld [vmem:[%s3 + $0x5c] sm:$0xf]
  %v360 = vld [vmem:[%s3 + $0x60] sm:$0xf]
  %v361 = vld [vmem:[%s3 + $0x64] sm:$0xf]
  %v362 = vld [vmem:[%s3 + $0x68] sm:$0xf]
  %v363 = vld [vmem:[%s3 + $0x6c] sm:$0xf]
  %v364 = vld [vmem:[%s3 + $0x70] sm:$0xf]
  %v365 = vld [vmem:[%s3 + $0x74] sm:$0xf]
  %v366 = vld [vmem:[%s3 + $0x78] sm:$0xf]
  %v367 = vld [vmem:[%s3 + $0x7c] sm:$0xf]
  %s368 = scalar_lea.vmem %s1, 2
  %v369 = vld [vmem:[%s368] sm:$0x3]
  %s370 = scalar_lea.vmem %s2, 4
  %v371 = vld [vmem:[%s370] sm:$0xf]
  %373 = vset.pattern.permute.xlu0 0
  %374 = vperm.xlu0 %373, %v371
  %v375 = vpop.permute.xlu0 %374
  %377 = vmatprep.subr.bf16.mxu0 %v183
  %378 = vmatpush1.bf16.msra.mxu0 %v182
  %379 = vmatprep.subr.bf16.mxu0 %v187
  %380 = vmatpush1.bf16.msra.mxu0 %v186
  %381 = vmatprep.subr.bf16.mxu0 %v191
  %382 = vmatpush1.bf16.msra.mxu0 %v190
  %383 = vmatprep.subr.bf16.mxu0 %v195
  %384 = vmatpush1.bf16.msra.mxu0 %v194
  %385 = vmatprep.subr.bf16.mxu0 %v199
  %386 = vmatpush1.bf16.msra.mxu0 %v198
  %387 = vmatprep.subr.bf16.mxu0 %v203
  %388 = vmatpush1.bf16.msra.mxu0 %v202
  %389 = vmatprep.subr.bf16.mxu0 %v207
  %390 = vmatpush1.bf16.msra.mxu0 %v206
  %391 = vmatprep.subr.bf16.mxu0 %v211
  %392 = vmatpush1.bf16.msra.mxu0 %v210
  %393 = vmatprep.subr.bf16.mxu0 0
  %394 = vmatpush1.bf16.msra.mxu0 0
  %395 = vmatprep.subr.bf16.mxu0 0
  %396 = vmatpush1.bf16.msra.mxu0 0
  %397 = vmatprep.subr.bf16.mxu0 0
  %398 = vmatpush1.bf16.msra.mxu0 0
  %399 = vmatprep.subr.bf16.mxu0 0
  %400 = vmatpush1.bf16.msra.mxu0 0
  %401 = vmatprep.subr.bf16.mxu0 0
  %402 = vmatpush1.bf16.msra.mxu0 0
  %403 = vmatprep.subr.bf16.mxu0 0
  %404 = vmatpush1.bf16.msra.mxu0 0
  %405 = vmatprep.subr.bf16.mxu0 0
  %406 = vmatpush1.bf16.msra.mxu0 0
  %407 = vmatprep.subr.bf16.mxu0 0
  %408 = vmatpush1.bf16.msra.mxu0 0
  %409 = vmatprep.mubr.bf16.mxu0 0
  %410 = vmatmul.mubr.bf16.gmra.mrb[0].mxu0 %v369
  %v411 = vpop.f32.mrb[0].mxu0
  %v412 = vadd.f32 %v375, %v411
  %v413 = vpop.f32.mrb[0].mxu0
  %v414 = vadd.f32 %v375, %v413
  %v415 = vpop.f32.mrb[0].mxu0
  %v416 = vpop.f32.mrb[0].mxu0
  %417 = vdwg.mxu0
  %418 = vmatprep.subr.bf16.mxu0 %v185
  %419 = vmatpush1.bf16.msra.mxu0 %v184
  %420 = vmatprep.subr.bf16.mxu0 %v189
  %421 = vmatpush1.bf16.msra.mxu0 %v188
  %422 = vmatprep.subr.bf16.mxu0 %v193
  %423 = vmatpush1.bf16.msra.mxu0 %v192
  %424 = vmatprep.subr.bf16.mxu0 %v197
  %425 = vmatpush1.bf16.msra.mxu0 %v196
  %426 = vmatprep.subr.bf16.mxu0 %v201
  %427 = vmatpush1.bf16.msra.mxu0 %v200
  %428 = vmatprep.subr.bf16.mxu0 %v205
  %429 = vmatpush1.bf16.msra.mxu0 %v204
  %430 = vmatprep.subr.bf16.mxu0 %v209
  %431 = vmatpush1.bf16.msra.mxu0 %v208
  %432 = vmatprep.subr.bf16.mxu0 %v213
  %433 = vmatpush1.bf16.msra.mxu0 %v212
  %434 = vmatprep.subr.bf16.mxu0 0
  %435 = vmatpush1.bf16.msra.mxu0 0
  %436 = vmatprep.subr.bf16.mxu0 0
  %437 = vmatpush1.bf16.msra.mxu0 0
  %438 = vmatprep.subr.bf16.mxu0 0
  %439 = vmatpush1.bf16.msra.mxu0 0
  %440 = vmatprep.subr.bf16.mxu0 0
  %441 = vmatpush1.bf16.msra.mxu0 0
  %442 = vmatprep.subr.bf16.mxu0 0
  %443 = vmatpush1.bf16.msra.mxu0 0
  %444 = vmatprep.subr.bf16.mxu0 0
  %445 = vmatpush1.bf16.msra.mxu0 0
  %446 = vmatprep.subr.bf16.mxu0 0
  %447 = vmatpush1.bf16.msra.mxu0 0
  %448 = vmatprep.subr.bf16.mxu0 0
  %449 = vmatpush1.bf16.msra.mxu0 0
  %450 = vmatprep.mubr.bf16.mxu0 0
  %451 = vmatmul.mubr.bf16.gmra.mrb[0].mxu0 %v369
  %v452 = vpop.f32.mrb[0].mxu0
  %v453 = vadd.f32 %v375, %v452
  %v454 = vpop.f32.mrb[0].mxu0
  %v455 = vadd.f32 %v375, %v454
  %v456 = vpop.f32.mrb[0].mxu0
  %v457 = vpop.f32.mrb[0].mxu0
  %458 = vdwg.mxu0
  %v459 = vmax.f32 %v412, 0.0
  %v460 = vmax.f32 %v414, 0.0
  %v461 = vmax.f32 %v453, 0.0
  %v462 = vmax.f32 %v455, 0.0
  %v463 = vmax.f32 %v459, %v461
  %v464 = vmax.f32 %v460, %v462
  %v465 = vpack.c.bf16 %v463, %v463
  %v466 = vpack.c.bf16 %v464, %v464
  %s467 = scalar_lea.vmem %s3, 128
  %v468 = vld [vmem:[%s467] sm:$0xf]
  %v469 = vld [vmem:[%s467 + $0x4] sm:$0xf]
  %v470 = vld [vmem:[%s467 + $0x8] sm:$0xf]
  %v471 = vld [vmem:[%s467 + $0xc] sm:$0xf]
  %v472 = vld [vmem:[%s467 + $0x10] sm:$0xf]
  %v473 = vld [vmem:[%s467 + $0x14] sm:$0xf]
  %v474 = vld [vmem:[%s467 + $0x18] sm:$0xf]
  %v475 = vld [vmem:[%s467 + $0x1c] sm:$0xf]
  %v476 = vld [vmem:[%s467 + $0x20] sm:$0xf]
  %v477 = vld [vmem:[%s467 + $0x24] sm:$0xf]
  %v478 = vld [vmem:[%s467 + $0x28] sm:$0xf]
  %v479 = vld [vmem:[%s467 + $0x2c] sm:$0xf]
  %v480 = vld [vmem:[%s467 + $0x30] sm:$0xf]
  %v481 = vld [vmem:[%s467 + $0x34] sm:$0xf]
  %v482 = vld [vmem:[%s467 + $0x38] sm:$0xf]
  %v483 = vld [vmem:[%s467 + $0x3c] sm:$0xf]
  %v484 = vld [vmem:[%s467 + $0x40] sm:$0xf]
  %v485 = vld [vmem:[%s467 + $0x44] sm:$0xf]
  %v486 = vld [vmem:[%s467 + $0x48] sm:$0xf]
  %v487 = vld [vmem:[%s467 + $0x4c] sm:$0xf]
  %v488 = vld [vmem:[%s467 + $0x50] sm:$0xf]
  %v489 = vld [vmem:[%s467 + $0x54] sm:$0xf]
  %v490 = vld [vmem:[%s467 + $0x58] sm:$0xf]
  %v491 = vld [vmem:[%s467 + $0x5c] sm:$0xf]
  %v492 = vld [vmem:[%s467 + $0x60] sm:$0xf]
  %v493 = vld [vmem:[%s467 + $0x64] sm:$0xf]
  %v494 = vld [vmem:[%s467 + $0x68] sm:$0xf]
  %v495 = vld [vmem:[%s467 + $0x6c] sm:$0xf]
  %v496 = vld [vmem:[%s467 + $0x70] sm:$0xf]
  %v497 = vld [vmem:[%s467 + $0x74] sm:$0xf]
  %v498 = vld [vmem:[%s467 + $0x78] sm:$0xf]
  %v499 = vld [vmem:[%s467 + $0x7c] sm:$0xf]
  %v532 = vunpack.c.l.b16 %v468
  %v533 = vunpack.c.l.b16 %v469
  %v534 = vunpack.c.l.b16 %v470
  %v535 = vunpack.c.l.b16 %v471
  %v536 = vunpack.c.l.b16 %v472
  %v537 = vunpack.c.l.b16 %v473
  %v538 = vunpack.c.l.b16 %v474
  %v539 = vunpack.c.l.b16 %v475
  %v540 = vunpack.c.l.b16 %v476
  %v541 = vunpack.c.l.b16 %v477
  %v542 = vunpack.c.l.b16 %v478
  %v543 = vunpack.c.l.b16 %v479
  %v544 = vunpack.c.l.b16 %v480
  %v545 = vunpack.c.l.b16 %v481
  %v546 = vunpack.c.l.b16 %v482
  %v547 = vunpack.c.l.b16 %v483
  %v548 = vunpack.c.l.b16 %v484
  %v549 = vunpack.c.l.b16 %v485
  %v550 = vunpack.c.l.b16 %v486
  %v551 = vunpack.c.l.b16 %v487
  %v552 = vunpack.c.l.b16 %v488
  %v553 = vunpack.c.l.b16 %v489
  %v554 = vunpack.c.l.b16 %v490
  %v555 = vunpack.c.l.b16 %v491
  %v556 = vunpack.c.l.b16 %v492
  %v557 = vunpack.c.l.b16 %v493
  %v558 = vunpack.c.l.b16 %v494
  %v559 = vunpack.c.l.b16 %v495
  %v560 = vunpack.c.l.b16 %v496
  %v561 = vunpack.c.l.b16 %v497
  %v562 = vunpack.c.l.b16 %v498
  %v563 = vunpack.c.l.b16 %v499
  %v564 = vpack.c.b16 %v533, %v532
  %v565 = vpack.c.b16 %v535, %v534
  %v566 = vpack.c.b16 %v537, %v536
  %v567 = vpack.c.b16 %v539, %v538
  %v568 = vpack.c.b16 %v541, %v540
  %v569 = vpack.c.b16 %v543, %v542
  %v570 = vpack.c.b16 %v545, %v544
  %v571 = vpack.c.b16 %v547, %v546
  %v572 = vpack.c.b16 %v549, %v548
  %v573 = vpack.c.b16 %v551, %v550
  %v574 = vpack.c.b16 %v553, %v552
  %v575 = vpack.c.b16 %v555, %v554
  %v576 = vpack.c.b16 %v557, %v556
  %v577 = vpack.c.b16 %v559, %v558
  %v578 = vpack.c.b16 %v561, %v560
  %v579 = vpack.c.b16 %v563, %v562
  %596 = vmatprep.subr.bf16.mxu0 0
  %597 = vmatpush1.bf16.msra.mxu0 %v564
  %598 = vmatprep.subr.bf16.mxu0 0
  %599 = vmatpush1.bf16.msra.mxu0 %v565
  %600 = vmatprep.subr.bf16.mxu0 0
  %601 = vmatpush1.bf16.msra.mxu0 %v566
  %602 = vmatprep.subr.bf16.mxu0 0
  %603 = vmatpush1.bf16.msra.mxu0 %v567
  %604 = vmatprep.subr.bf16.mxu0 0
  %605 = vmatpush1.bf16.msra.mxu0 %v568
  %606 = vmatprep.subr.bf16.mxu0 0
  %607 = vmatpush1.bf16.msra.mxu0 %v569
  %608 = vmatprep.subr.bf16.mxu0 0
  %609 = vmatpush1.bf16.msra.mxu0 %v570
  %610 = vmatprep.subr.bf16.mxu0 0
  %611 = vmatpush1.bf16.msra.mxu0 %v571
  %612 = vmatprep.subr.bf16.mxu0 0
  %613 = vmatpush1.bf16.msra.mxu0 %v572
  %614 = vmatprep.subr.bf16.mxu0 0
  %615 = vmatpush1.bf16.msra.mxu0 %v573
  %616 = vmatprep.subr.bf16.mxu0 0
  %617 = vmatpush1.bf16.msra.mxu0 %v574
  %618 = vmatprep.subr.bf16.mxu0 0
  %619 = vmatpush1.bf16.msra.mxu0 %v575
  %620 = vmatprep.subr.bf16.mxu0 0
  %621 = vmatpush1.bf16.msra.mxu0 %v576
  %622 = vmatprep.subr.bf16.mxu0 0
  %623 = vmatpush1.bf16.msra.mxu0 %v577
  %624 = vmatprep.subr.bf16.mxu0 0
  %625 = vmatpush1.bf16.msra.mxu0 %v578
  %626 = vmatprep.subr.bf16.mxu0 0
  %627 = vmatpush1.bf16.msra.mxu0 %v579
  %628 = vmatprep.mubr.bf16.mxu0 %v466
  %629 = vmatmul.mubr.bf16.gmra.mrb[0].mxu0 %v465
  %v630 = vpop.f32.mrb[0].mxu0
  %v631 = vadd.f32 0.0, %v630
  %v632 = vpop.f32.mrb[0].mxu0
  %v633 = vpop.f32.mrb[0].mxu0
  %v634 = vpop.f32.mrb[0].mxu0
  %635 = vdwg.mxu0
  %v668 = vunpack.c.l.b16 %v336
  %v669 = vunpack.c.l.b16 %v337
  %v670 = vunpack.c.l.b16 %v338
  %v671 = vunpack.c.l.b16 %v339
  %v672 = vunpack.c.l.b16 %v340
  %v673 = vunpack.c.l.b16 %v341
  %v674 = vunpack.c.l.b16 %v342
  %v675 = vunpack.c.l.b16 %v343
  %v676 = vunpack.c.l.b16 %v344
  %v677 = vunpack.c.l.b16 %v345
  %v678 = vunpack.c.l.b16 %v346
  %v679 = vunpack.c.l.b16 %v347
  %v680 = vunpack.c.l.b16 %v348
  %v681 = vunpack.c.l.b16 %v349
  %v682 = vunpack.c.l.b16 %v350
  %v683 = vunpack.c.l.b16 %v351
  %v684 = vunpack.c.l.b16 %v352
  %v685 = vunpack.c.l.b16 %v353
  %v686 = vunpack.c.l.b16 %v354
  %v687 = vunpack.c.l.b16 %v355
  %v688 = vunpack.c.l.b16 %v356
  %v689 = vunpack.c.l.b16 %v357
  %v690 = vunpack.c.l.b16 %v358
  %v691 = vunpack.c.l.b16 %v359
  %v692 = vunpack.c.l.b16 %v360
  %v693 = vunpack.c.l.b16 %v361
  %v694 = vunpack.c.l.b16 %v362
  %v695 = vunpack.c.l.b16 %v363
  %v696 = vunpack.c.l.b16 %v364
  %v697 = vunpack.c.l.b16 %v365
  %v698 = vunpack.c.l.b16 %v366
  %v699 = vunpack.c.l.b16 %v367
  %v700 = vpack.c.b16 %v669, %v668
  %v701 = vpack.c.b16 %v671, %v670
  %v702 = vpack.c.b16 %v673, %v672
  %v703 = vpack.c.b16 %v675, %v674
  %v704 = vpack.c.b16 %v677, %v676
  %v705 = vpack.c.b16 %v679, %v678
  %v706 = vpack.c.b16 %v681, %v680
  %v707 = vpack.c.b16 %v683, %v682
  %v708 = vpack.c.b16 %v685, %v684
  %v709 = vpack.c.b16 %v687, %v686
  %v710 = vpack.c.b16 %v689, %v688
  %v711 = vpack.c.b16 %v691, %v690
  %v712 = vpack.c.b16 %v693, %v692
  %v713 = vpack.c.b16 %v695, %v694
  %v714 = vpack.c.b16 %v697, %v696
  %v715 = vpack.c.b16 %v699, %v698
  %732 = vmatprep.subr.bf16.mxu0 0
  %733 = vmatpush1.bf16.msra.mxu0 %v700
  %734 = vmatprep.subr.bf16.mxu0 0
  %735 = vmatpush1.bf16.msra.mxu0 %v701
  %736 = vmatprep.subr.bf16.mxu0 0
  %737 = vmatpush1.bf16.msra.mxu0 %v702
  %738 = vmatprep.subr.bf16.mxu0 0
  %739 = vmatpush1.bf16.msra.mxu0 %v703
  %740 = vmatprep.subr.bf16.mxu0 0
  %741 = vmatpush1.bf16.msra.mxu0 %v704
  %742 = vmatprep.subr.bf16.mxu0 0
  %743 = vmatpush1.bf16.msra.mxu0 %v705
  %744 = vmatprep.subr.bf16.mxu0 0
  %745 = vmatpush1.bf16.msra.mxu0 %v706
  %746 = vmatprep.subr.bf16.mxu0 0
  %747 = vmatpush1.bf16.msra.mxu0 %v707
  %748 = vmatprep.subr.bf16.mxu0 0
  %749 = vmatpush1.bf16.msra.mxu0 %v708
  %750 = vmatprep.subr.bf16.mxu0 0
  %751 = vmatpush1.bf16.msra.mxu0 %v709
  %752 = vmatprep.subr.bf16.mxu0 0
  %753 = vmatpush1.bf16.msra.mxu0 %v710
  %754 = vmatprep.subr.bf16.mxu0 0
  %755 = vmatpush1.bf16.msra.mxu0 %v711
  %756 = vmatprep.subr.bf16.mxu0 0
  %757 = vmatpush1.bf16.msra.mxu0 %v712
  %758 = vmatprep.subr.bf16.mxu0 0
  %759 = vmatpush1.bf16.msra.mxu0 %v713
  %760 = vmatprep.subr.bf16.mxu0 0
  %761 = vmatpush1.bf16.msra.mxu0 %v714
  %762 = vmatprep.subr.bf16.mxu0 0
  %763 = vmatpush1.bf16.msra.mxu0 %v715
  %764 = vmatprep.mubr.bf16.mxu0 %v335
  %765 = vmatmul.mubr.bf16.gmra.mrb[0].mxu0 %v334
  %v766 = vpop.f32.mrb[0].mxu0
  %v767 = vadd.f32 %v631, %v766
  %v768 = vpop.f32.mrb[0].mxu0
  %v769 = vpop.f32.mrb[0].mxu0
  %v770 = vpop.f32.mrb[0].mxu0
  %771 = vdwg.mxu0
  %s772 = scalar_lea.vmem %s1, 4
  %v773 = vld [vmem:[%s772] sm:$0x3]
  %s774 = scalar_lea.vmem %s2, 8
  %v775 = vld [vmem:[%s774] sm:$0xf]
  %777 = vset.pattern.permute.xlu0 0
  %778 = vperm.xlu0 %777, %v775
  %v779 = vpop.permute.xlu0 %778
  %781 = vmatprep.subr.bf16.mxu0 %v183
  %782 = vmatpush1.bf16.msra.mxu0 %v182
  %783 = vmatprep.subr.bf16.mxu0 %v187
  %784 = vmatpush1.bf16.msra.mxu0 %v186
  %785 = vmatprep.subr.bf16.mxu0 %v191
  %786 = vmatpush1.bf16.msra.mxu0 %v190
  %787 = vmatprep.subr.bf16.mxu0 %v195
  %788 = vmatpush1.bf16.msra.mxu0 %v194
  %789 = vmatprep.subr.bf16.mxu0 %v199
  %790 = vmatpush1.bf16.msra.mxu0 %v198
  %791 = vmatprep.subr.bf16.mxu0 %v203
  %792 = vmatpush1.bf16.msra.mxu0 %v202
  %793 = vmatprep.subr.bf16.mxu0 %v207
  %794 = vmatpush1.bf16.msra.mxu0 %v206
  %795 = vmatprep.subr.bf16.mxu0 %v211
  %796 = vmatpush1.bf16.msra.mxu0 %v210
  %797 = vmatprep.subr.bf16.mxu0 0
  %798 = vmatpush1.bf16.msra.mxu0 0
  %799 = vmatprep.subr.bf16.mxu0 0
  %800 = vmatpush1.bf16.msra.mxu0 0
  %801 = vmatprep.subr.bf16.mxu0 0
  %802 = vmatpush1.bf16.msra.mxu0 0
  %803 = vmatprep.subr.bf16.mxu0 0
  %804 = vmatpush1.bf16.msra.mxu0 0
  %805 = vmatprep.subr.bf16.mxu0 0
  %806 = vmatpush1.bf16.msra.mxu0 0
  %807 = vmatprep.subr.bf16.mxu0 0
  %808 = vmatpush1.bf16.msra.mxu0 0
  %809 = vmatprep.subr.bf16.mxu0 0
  %810 = vmatpush1.bf16.msra.mxu0 0
  %811 = vmatprep.subr.bf16.mxu0 0
  %812 = vmatpush1.bf16.msra.mxu0 0
  %813 = vmatprep.mubr.bf16.mxu0 0
  %814 = vmatmul.mubr.bf16.gmra.mrb[0].mxu0 %v773
  %v815 = vpop.f32.mrb[0].mxu0
  %v816 = vadd.f32 %v779, %v815
  %v817 = vpop.f32.mrb[0].mxu0
  %v818 = vadd.f32 %v779, %v817
  %v819 = vpop.f32.mrb[0].mxu0
  %v820 = vpop.f32.mrb[0].mxu0
  %821 = vdwg.mxu0
  %822 = vmatprep.subr.bf16.mxu0 %v185
  %823 = vmatpush1.bf16.msra.mxu0 %v184
  %824 = vmatprep.subr.bf16.mxu0 %v189
  %825 = vmatpush1.bf16.msra.mxu0 %v188
  %826 = vmatprep.subr.bf16.mxu0 %v193
  %827 = vmatpush1.bf16.msra.mxu0 %v192
  %828 = vmatprep.subr.bf16.mxu0 %v197
  %829 = vmatpush1.bf16.msra.mxu0 %v196
  %830 = vmatprep.subr.bf16.mxu0 %v201
  %831 = vmatpush1.bf16.msra.mxu0 %v200
  %832 = vmatprep.subr.bf16.mxu0 %v205
  %833 = vmatpush1.bf16.msra.mxu0 %v204
  %834 = vmatprep.subr.bf16.mxu0 %v209
  %835 = vmatpush1.bf16.msra.mxu0 %v208
  %836 = vmatprep.subr.bf16.mxu0 %v213
  %837 = vmatpush1.bf16.msra.mxu0 %v212
  %838 = vmatprep.subr.bf16.mxu0 0
  %839 = vmatpush1.bf16.msra.mxu0 0
  %840 = vmatprep.subr.bf16.mxu0 0
  %841 = vmatpush1.bf16.msra.mxu0 0
  %842 = vmatprep.subr.bf16.mxu0 0
  %843 = vmatpush1.bf16.msra.mxu0 0
  %844 = vmatprep.subr.bf16.mxu0 0
  %845 = vmatpush1.bf16.msra.mxu0 0
  %846 = vmatprep.subr.bf16.mxu0 0
  %847 = vmatpush1.bf16.msra.mxu0 0
  %848 = vmatprep.subr.bf16.mxu0 0
  %849 = vmatpush1.bf16.msra.mxu0 0
  %850 = vmatprep.subr.bf16.mxu0 0
  %851 = vmatpush1.bf16.msra.mxu0 0
  %852 = vmatprep.subr.bf16.mxu0 0
  %853 = vmatpush1.bf16.msra.mxu0 0
  %854 = vmatprep.mubr.bf16.mxu0 0
  %855 = vmatmul.mubr.bf16.gmra.mrb[0].mxu0 %v773
  %v856 = vpop.f32.mrb[0].mxu0
  %v857 = vadd.f32 %v779, %v856
  %v858 = vpop.f32.mrb[0].mxu0
  %v859 = vadd.f32 %v779, %v858
  %v860 = vpop.f32.mrb[0].mxu0
  %v861 = vpop.f32.mrb[0].mxu0
  %862 = vdwg.mxu0
  %v863 = vmax.f32 %v816, 0.0
  %v864 = vmax.f32 %v818, 0.0
  %v865 = vmax.f32 %v857, 0.0
  %v866 = vmax.f32 %v859, 0.0
  %v867 = vmax.f32 %v863, %v865
  %v868 = vmax.f32 %v864, %v866
  %v869 = vpack.c.bf16 %v867, %v867
  %v870 = vpack.c.bf16 %v868, %v868
  %s871 = scalar_lea.vmem %s3, 256
  %v872 = vld [vmem:[%s871] sm:$0xf]
  %v873 = vld [vmem:[%s871 + $0x4] sm:$0xf]
  %v874 = vld [vmem:[%s871 + $0x8] sm:$0xf]
  %v875 = vld [vmem:[%s871 + $0xc] sm:$0xf]
  %v876 = vld [vmem:[%s871 + $0x10] sm:$0xf]
  %v877 = vld [vmem:[%s871 + $0x14] sm:$0xf]
  %v878 = vld [vmem:[%s871 + $0x18] sm:$0xf]
  %v879 = vld [vmem:[%s871 + $0x1c] sm:$0xf]
  %v880 = vld [vmem:[%s871 + $0x20] sm:$0xf]
  %v881 = vld [vmem:[%s871 + $0x24] sm:$0xf]
  %v882 = vld [vmem:[%s871 + $0x28] sm:$0xf]
  %v883 = vld [vmem:[%s871 + $0x2c] sm:$0xf]
  %v884 = vld [vmem:[%s871 + $0x30] sm:$0xf]
  %v885 = vld [vmem:[%s871 + $0x34] sm:$0xf]
  %v886 = vld [vmem:[%s871 + $0x38] sm:$0xf]
  %v887 = vld [vmem:[%s871 + $0x3c] sm:$0xf]
  %v888 = vld [vmem:[%s871 + $0x40] sm:$0xf]
  %v889 = vld [vmem:[%s871 + $0x44] sm:$0xf]
  %v890 = vld [vmem:[%s871 + $0x48] sm:$0xf]
  %v891 = vld [vmem:[%s871 + $0x4c] sm:$0xf]
  %v892 = vld [vmem:[%s871 + $0x50] sm:$0xf]
  %v893 = vld [vmem:[%s871 + $0x54] sm:$0xf]
  %v894 = vld [vmem:[%s871 + $0x58] sm:$0xf]
  %v895 = vld [vmem:[%s871 + $0x5c] sm:$0xf]
  %v896 = vld [vmem:[%s871 + $0x60] sm:$0xf]
  %v897 = vld [vmem:[%s871 + $0x64] sm:$0xf]
  %v898 = vld [vmem:[%s871 + $0x68] sm:$0xf]
  %v899 = vld [vmem:[%s871 + $0x6c] sm:$0xf]
  %v900 = vld [vmem:[%s871 + $0x70] sm:$0xf]
  %v901 = vld [vmem:[%s871 + $0x74] sm:$0xf]
  %v902 = vld [vmem:[%s871 + $0x78] sm:$0xf]
  %v903 = vld [vmem:[%s871 + $0x7c] sm:$0xf]
  %v936 = vunpack.c.l.b16 %v872
  %v937 = vunpack.c.l.b16 %v873
  %v938 = vunpack.c.l.b16 %v874
  %v939 = vunpack.c.l.b16 %v875
  %v940 = vunpack.c.l.b16 %v876
  %v941 = vunpack.c.l.b16 %v877
  %v942 = vunpack.c.l.b16 %v878
  %v943 = vunpack.c.l.b16 %v879
  %v944 = vunpack.c.l.b16 %v880
  %v945 = vunpack.c.l.b16 %v881
  %v946 = vunpack.c.l.b16 %v882
  %v947 = vunpack.c.l.b16 %v883
  %v948 = vunpack.c.l.b16 %v884
  %v949 = vunpack.c.l.b16 %v885
  %v950 = vunpack.c.l.b16 %v886
  %v951 = vunpack.c.l.b16 %v887
  %v952 = vunpack.c.l.b16 %v888
  %v953 = vunpack.c.l.b16 %v889
  %v954 = vunpack.c.l.b16 %v890
  %v955 = vunpack.c.l.b16 %v891
  %v956 = vunpack.c.l.b16 %v892
  %v957 = vunpack.c.l.b16 %v893
  %v958 = vunpack.c.l.b16 %v894
  %v959 = vunpack.c.l.b16 %v895
  %v960 = vunpack.c.l.b16 %v896
  %v961 = vunpack.c.l.b16 %v897
  %v962 = vunpack.c.l.b16 %v898
  %v963 = vunpack.c.l.b16 %v899
  %v964 = vunpack.c.l.b16 %v900
  %v965 = vunpack.c.l.b16 %v901
  %v966 = vunpack.c.l.b16 %v902
  %v967 = vunpack.c.l.b16 %v903
  %v968 = vpack.c.b16 %v937, %v936
  %v969 = vpack.c.b16 %v939, %v938
  %v970 = vpack.c.b16 %v941, %v940
  %v971 = vpack.c.b16 %v943, %v942
  %v972 = vpack.c.b16 %v945, %v944
  %v973 = vpack.c.b16 %v947, %v946
  %v974 = vpack.c.b16 %v949, %v948
  %v975 = vpack.c.b16 %v951, %v950
  %v976 = vpack.c.b16 %v953, %v952
  %v977 = vpack.c.b16 %v955, %v954
  %v978 = vpack.c.b16 %v957, %v956
  %v979 = vpack.c.b16 %v959, %v958
  %v980 = vpack.c.b16 %v961, %v960
  %v981 = vpack.c.b16 %v963, %v962
  %v982 = vpack.c.b16 %v965, %v964
  %v983 = vpack.c.b16 %v967, %v966
  %1000 = vmatprep.subr.bf16.mxu0 0
  %1001 = vmatpush1.bf16.msra.mxu0 %v968
  %1002 = vmatprep.subr.bf16.mxu0 0
  %1003 = vmatpush1.bf16.msra.mxu0 %v969
  %1004 = vmatprep.subr.bf16.mxu0 0
  %1005 = vmatpush1.bf16.msra.mxu0 %v970
  %1006 = vmatprep.subr.bf16.mxu0 0
  %1007 = vmatpush1.bf16.msra.mxu0 %v971
  %1008 = vmatprep.subr.bf16.mxu0 0
  %1009 = vmatpush1.bf16.msra.mxu0 %v972
  %1010 = vmatprep.subr.bf16.mxu0 0
  %1011 = vmatpush1.bf16.msra.mxu0 %v973
  %1012 = vmatprep.subr.bf16.mxu0 0
  %1013 = vmatpush1.bf16.msra.mxu0 %v974
  %1014 = vmatprep.subr.bf16.mxu0 0
  %1015 = vmatpush1.bf16.msra.mxu0 %v975
  %1016 = vmatprep.subr.bf16.mxu0 0
  %1017 = vmatpush1.bf16.msra.mxu0 %v976
  %1018 = vmatprep.subr.bf16.mxu0 0
  %1019 = vmatpush1.bf16.msra.mxu0 %v977
  %1020 = vmatprep.subr.bf16.mxu0 0
  %1021 = vmatpush1.bf16.msra.mxu0 %v978
  %1022 = vmatprep.subr.bf16.mxu0 0
  %1023 = vmatpush1.bf16.msra.mxu0 %v979
  %1024 = vmatprep.subr.bf16.mxu0 0
  %1025 = vmatpush1.bf16.msra.mxu0 %v980
  %1026 = vmatprep.subr.bf16.mxu0 0
  %1027 = vmatpush1.bf16.msra.mxu0 %v981
  %1028 = vmatprep.subr.bf16.mxu0 0
  %1029 = vmatpush1.bf16.msra.mxu0 %v982
  %1030 = vmatprep.subr.bf16.mxu0 0
  %1031 = vmatpush1.bf16.msra.mxu0 %v983
  %1032 = vmatprep.mubr.bf16.mxu0 %v870
  %1033 = vmatmul.mubr.bf16.gmra.mrb[0].mxu0 %v869
  %v1034 = vpop.f32.mrb[0].mxu0
  %v1035 = vadd.f32 0.0, %v1034
  %v1036 = vpop.f32.mrb[0].mxu0
  %v1037 = vpop.f32.mrb[0].mxu0
  %v1038 = vpop.f32.mrb[0].mxu0
  %1039 = vdwg.mxu0
  %v1040 = vadd.f32 %v767, %v1035
  %s1041 = scalar_lea.vmem %s1, 6
  %v1042 = vld [vmem:[%s1041] sm:$0x3]
  %s1043 = scalar_lea.vmem %s2, 12
  %v1044 = vld [vmem:[%s1043] sm:$0xf]
  %1046 = vset.pattern.permute.xlu0 0
  %1047 = vperm.xlu0 %1046, %v1044
  %v1048 = vpop.permute.xlu0 %1047
  %1050 = vmatprep.subr.bf16.mxu0 %v183
  %1051 = vmatpush1.bf16.msra.mxu0 %v182
  %1052 = vmatprep.subr.bf16.mxu0 %v187
  %1053 = vmatpush1.bf16.msra.mxu0 %v186
  %1054 = vmatprep.subr.bf16.mxu0 %v191
  %1055 = vmatpush1.bf16.msra.mxu0 %v190
  %1056 = vmatprep.subr.bf16.mxu0 %v195
  %1057 = vmatpush1.bf16.msra.mxu0 %v194
  %1058 = vmatprep.subr.bf16.mxu0 %v199
  %1059 = vmatpush1.bf16.msra.mxu0 %v198
  %1060 = vmatprep.subr.bf16.mxu0 %v203
  %1061 = vmatpush1.bf16.msra.mxu0 %v202
  %1062 = vmatprep.subr.bf16.mxu0 %v207
  %1063 = vmatpush1.bf16.msra.mxu0 %v206
  %1064 = vmatprep.subr.bf16.mxu0 %v211
  %1065 = vmatpush1.bf16.msra.mxu0 %v210
  %1066 = vmatprep.subr.bf16.mxu0 0
  %1067 = vmatpush1.bf16.msra.mxu0 0
  %1068 = vmatprep.subr.bf16.mxu0 0
  %1069 = vmatpush1.bf16.msra.mxu0 0
  %1070 = vmatprep.subr.bf16.mxu0 0
  %1071 = vmatpush1.bf16.msra.mxu0 0
  %1072 = vmatprep.subr.bf16.mxu0 0
  %1073 = vmatpush1.bf16.msra.mxu0 0
  %1074 = vmatprep.subr.bf16.mxu0 0
  %1075 = vmatpush1.bf16.msra.mxu0 0
  %1076 = vmatprep.subr.bf16.mxu0 0
  %1077 = vmatpush1.bf16.msra.mxu0 0
  %1078 = vmatprep.subr.bf16.mxu0 0
  %1079 = vmatpush1.bf16.msra.mxu0 0
  %1080 = vmatprep.subr.bf16.mxu0 0
  %1081 = vmatpush1.bf16.msra.mxu0 0
  %1082 = vmatprep.mubr.bf16.mxu0 0
  %1083 = vmatmul.mubr.bf16.gmra.mrb[0].mxu0 %v1042
  %v1084 = vpop.f32.mrb[0].mxu0
  %v1085 = vadd.f32 %v1048, %v1084
  %v1086 = vpop.f32.mrb[0].mxu0
  %v1087 = vadd.f32 %v1048, %v1086
  %v1088 = vpop.f32.mrb[0].mxu0
  %v1089 = vpop.f32.mrb[0].mxu0
  %1090 = vdwg.mxu0
  %1091 = vmatprep.subr.bf16.mxu0 %v185
  %1092 = vmatpush1.bf16.msra.mxu0 %v184
  %1093 = vmatprep.subr.bf16.mxu0 %v189
  %1094 = vmatpush1.bf16.msra.mxu0 %v188
  %1095 = vmatprep.subr.bf16.mxu0 %v193
  %1096 = vmatpush1.bf16.msra.mxu0 %v192
  %1097 = vmatprep.subr.bf16.mxu0 %v197
  %1098 = vmatpush1.bf16.msra.mxu0 %v196
  %1099 = vmatprep.subr.bf16.mxu0 %v201
  %1100 = vmatpush1.bf16.msra.mxu0 %v200
  %1101 = vmatprep.subr.bf16.mxu0 %v205
  %1102 = vmatpush1.bf16.msra.mxu0 %v204
  %1103 = vmatprep.subr.bf16.mxu0 %v209
  %1104 = vmatpush1.bf16.msra.mxu0 %v208
  %1105 = vmatprep.subr.bf16.mxu0 %v213
  %1106 = vmatpush1.bf16.msra.mxu0 %v212
  %1107 = vmatprep.subr.bf16.mxu0 0
  %1108 = vmatpush1.bf16.msra.mxu0 0
  %1109 = vmatprep.subr.bf16.mxu0 0
  %1110 = vmatpush1.bf16.msra.mxu0 0
  %1111 = vmatprep.subr.bf16.mxu0 0
  %1112 = vmatpush1.bf16.msra.mxu0 0
  %1113 = vmatprep.subr.bf16.mxu0 0
  %1114 = vmatpush1.bf16.msra.mxu0 0
  %1115 = vmatprep.subr.bf16.mxu0 0
  %1116 = vmatpush1.bf16.msra.mxu0 0
  %1117 = vmatprep.subr.bf16.mxu0 0
  %1118 = vmatpush1.bf16.msra.mxu0 0
  %1119 = vmatprep.subr.bf16.mxu0 0
  %1120 = vmatpush1.bf16.msra.mxu0 0
  %1121 = vmatprep.subr.bf16.mxu0 0
  %1122 = vmatpush1.bf16.msra.mxu0 0
  %1123 = vmatprep.mubr.bf16.mxu0 0
  %1124 = vmatmul.mubr.bf16.gmra.mrb[0].mxu0 %v1042
  %v1125 = vpop.f32.mrb[0].mxu0
  %v1126 = vadd.f32 %v1048, %v1125
  %v1127 = vpop.f32.mrb[0].mxu0
  %v1128 = vadd.f32 %v1048, %v1127
  %v1129 = vpop.f32.mrb[0].mxu0
  %v1130 = vpop.f32.mrb[0].mxu0
  %1131 = vdwg.mxu0
  %v1132 = vmax.f32 %v1085, 0.0
  %v1133 = vmax.f32 %v1087, 0.0
  %v1134 = vmax.f32 %v1126, 0.0
  %v1135 = vmax.f32 %v1128, 0.0
  %v1136 = vmax.f32 %v1132, %v1134
  %v1137 = vmax.f32 %v1133, %v1135
  %v1138 = vpack.c.bf16 %v1136, %v1136
  %v1139 = vpack.c.bf16 %v1137, %v1137
  %s1140 = scalar_lea.vmem %s3, 384
  %v1141 = vld [vmem:[%s1140] sm:$0xf]
  %v1142 = vld [vmem:[%s1140 + $0x4] sm:$0xf]
  %v1143 = vld [vmem:[%s1140 + $0x8] sm:$0xf]
  %v1144 = vld [vmem:[%s1140 + $0xc] sm:$0xf]
  %v1145 = vld [vmem:[%s1140 + $0x10] sm:$0xf]
  %v1146 = vld [vmem:[%s1140 + $0x14] sm:$0xf]
  %v1147 = vld [vmem:[%s1140 + $0x18] sm:$0xf]
  %v1148 = vld [vmem:[%s1140 + $0x1c] sm:$0xf]
  %v1149 = vld [vmem:[%s1140 + $0x20] sm:$0xf]
  %v1150 = vld [vmem:[%s1140 + $0x24] sm:$0xf]
  %v1151 = vld [vmem:[%s1140 + $0x28] sm:$0xf]
  %v1152 = vld [vmem:[%s1140 + $0x2c] sm:$0xf]
  %v1153 = vld [vmem:[%s1140 + $0x30] sm:$0xf]
  %v1154 = vld [vmem:[%s1140 + $0x34] sm:$0xf]
  %v1155 = vld [vmem:[%s1140 + $0x38] sm:$0xf]
  %v1156 = vld [vmem:[%s1140 + $0x3c] sm:$0xf]
  %v1157 = vld [vmem:[%s1140 + $0x40] sm:$0xf]
  %v1158 = vld [vmem:[%s1140 + $0x44] sm:$0xf]
  %v1159 = vld [vmem:[%s1140 + $0x48] sm:$0xf]
  %v1160 = vld [vmem:[%s1140 + $0x4c] sm:$0xf]
  %v1161 = vld [vmem:[%s1140 + $0x50] sm:$0xf]
  %v1162 = vld [vmem:[%s1140 + $0x54] sm:$0xf]
  %v1163 = vld [vmem:[%s1140 + $0x58] sm:$0xf]
  %v1164 = vld [vmem:[%s1140 + $0x5c] sm:$0xf]
  %v1165 = vld [vmem:[%s1140 + $0x60] sm:$0xf]
  %v1166 = vld [vmem:[%s1140 + $0x64] sm:$0xf]
  %v1167 = vld [vmem:[%s1140 + $0x68] sm:$0xf]
  %v1168 = vld [vmem:[%s1140 + $0x6c] sm:$0xf]
  %v1169 = vld [vmem:[%s1140 + $0x70] sm:$0xf]
  %v1170 = vld [vmem:[%s1140 + $0x74] sm:$0xf]
  %v1171 = vld [vmem:[%s1140 + $0x78] sm:$0xf]
  %v1172 = vld [vmem:[%s1140 + $0x7c] sm:$0xf]
  %v1205 = vunpack.c.l.b16 %v1141
  %v1206 = vunpack.c.l.b16 %v1142
  %v1207 = vunpack.c.l.b16 %v1143
  %v1208 = vunpack.c.l.b16 %v1144
  %v1209 = vunpack.c.l.b16 %v1145
  %v1210 = vunpack.c.l.b16 %v1146
  %v1211 = vunpack.c.l.b16 %v1147
  %v1212 = vunpack.c.l.b16 %v1148
  %v1213 = vunpack.c.l.b16 %v1149
  %v1214 = vunpack.c.l.b16 %v1150
  %v1215 = vunpack.c.l.b16 %v1151
  %v1216 = vunpack.c.l.b16 %v1152
  %v1217 = vunpack.c.l.b16 %v1153
  %v1218 = vunpack.c.l.b16 %v1154
  %v1219 = vunpack.c.l.b16 %v1155
  %v1220 = vunpack.c.l.b16 %v1156
  %v1221 = vunpack.c.l.b16 %v1157
  %v1222 = vunpack.c.l.b16 %v1158
  %v1223 = vunpack.c.l.b16 %v1159
  %v1224 = vunpack.c.l.b16 %v1160
  %v1225 = vunpack.c.l.b16 %v1161
  %v1226 = vunpack.c.l.b16 %v1162
  %v1227 = vunpack.c.l.b16 %v1163
  %v1228 = vunpack.c.l.b16 %v1164
  %v1229 = vunpack.c.l.b16 %v1165
  %v1230 = vunpack.c.l.b16 %v1166
  %v1231 = vunpack.c.l.b16 %v1167
  %v1232 = vunpack.c.l.b16 %v1168
  %v1233 = vunpack.c.l.b16 %v1169
  %v1234 = vunpack.c.l.b16 %v1170
  %v1235 = vunpack.c.l.b16 %v1171
  %v1236 = vunpack.c.l.b16 %v1172
  %v1237 = vpack.c.b16 %v1206, %v1205
  %v1238 = vpack.c.b16 %v1208, %v1207
  %v1239 = vpack.c.b16 %v1210, %v1209
  %v1240 = vpack.c.b16 %v1212, %v1211
  %v1241 = vpack.c.b16 %v1214, %v1213
  %v1242 = vpack.c.b16 %v1216, %v1215
  %v1243 = vpack.c.b16 %v1218, %v1217
  %v1244 = vpack.c.b16 %v1220, %v1219
  %v1245 = vpack.c.b16 %v1222, %v1221
  %v1246 = vpack.c.b16 %v1224, %v1223
  %v1247 = vpack.c.b16 %v1226, %v1225
  %v1248 = vpack.c.b16 %v1228, %v1227
  %v1249 = vpack.c.b16 %v1230, %v1229
  %v1250 = vpack.c.b16 %v1232, %v1231
  %v1251 = vpack.c.b16 %v1234, %v1233
  %v1252 = vpack.c.b16 %v1236, %v1235
  %1269 = vmatprep.subr.bf16.mxu0 0
  %1270 = vmatpush1.bf16.msra.mxu0 %v1237
  %1271 = vmatprep.subr.bf16.mxu0 0
  %1272 = vmatpush1.bf16.msra.mxu0 %v1238
  %1273 = vmatprep.subr.bf16.mxu0 0
  %1274 = vmatpush1.bf16.msra.mxu0 %v1239
  %1275 = vmatprep.subr.bf16.mxu0 0
  %1276 = vmatpush1.bf16.msra.mxu0 %v1240
  %1277 = vmatprep.subr.bf16.mxu0 0
  %1278 = vmatpush1.bf16.msra.mxu0 %v1241
  %1279 = vmatprep.subr.bf16.mxu0 0
  %1280 = vmatpush1.bf16.msra.mxu0 %v1242
  %1281 = vmatprep.subr.bf16.mxu0 0
  %1282 = vmatpush1.bf16.msra.mxu0 %v1243
  %1283 = vmatprep.subr.bf16.mxu0 0
  %1284 = vmatpush1.bf16.msra.mxu0 %v1244
  %1285 = vmatprep.subr.bf16.mxu0 0
  %1286 = vmatpush1.bf16.msra.mxu0 %v1245
  %1287 = vmatprep.subr.bf16.mxu0 0
  %1288 = vmatpush1.bf16.msra.mxu0 %v1246
  %1289 = vmatprep.subr.bf16.mxu0 0
  %1290 = vmatpush1.bf16.msra.mxu0 %v1247
  %1291 = vmatprep.subr.bf16.mxu0 0
  %1292 = vmatpush1.bf16.msra.mxu0 %v1248
  %1293 = vmatprep.subr.bf16.mxu0 0
  %1294 = vmatpush1.bf16.msra.mxu0 %v1249
  %1295 = vmatprep.subr.bf16.mxu0 0
  %1296 = vmatpush1.bf16.msra.mxu0 %v1250
  %1297 = vmatprep.subr.bf16.mxu0 0
  %1298 = vmatpush1.bf16.msra.mxu0 %v1251
  %1299 = vmatprep.subr.bf16.mxu0 0
  %1300 = vmatpush1.bf16.msra.mxu0 %v1252
  %1301 = vmatprep.mubr.bf16.mxu0 %v1139
  %1302 = vmatmul.mubr.bf16.gmra.mrb[0].mxu0 %v1138
  %v1303 = vpop.f32.mrb[0].mxu0
  %v1304 = vadd.f32 0.0, %v1303
  %v1305 = vpop.f32.mrb[0].mxu0
  %v1306 = vpop.f32.mrb[0].mxu0
  %v1307 = vpop.f32.mrb[0].mxu0
  %1308 = vdwg.mxu0
  %v1309 = vadd.f32 %v1040, %v1304
  %v1310 = vld [vmem:[%s4] sm:$0x1]
  %v1312 = vlaneseq
  %v1313 = vshrl.u32 %v1312, 7
  %v1314 = vsub.s32 0, %v1313
  %v1315 = vrot.slane %v1310, %v1314
  %v1317 = vadd.f32 %v1309, %v1315
  %v1318 = vmax.f32 %v1317, 0.0
  %v1319 = vld [vmem:[%s5] sm:$0xff]
  %v1320 = vld [vmem:[%s5 + $0x8] sm:$0xff]
  %v1321 = vld [vmem:[%s5 + $0x10] sm:$0xff]
  %v1322 = vld [vmem:[%s5 + $0x18] sm:$0xff]
  %v1323 = vld [vmem:[%s5 + $0x20] sm:$0xff]
  %v1324 = vld [vmem:[%s5 + $0x28] sm:$0xff]
  %v1325 = vld [vmem:[%s5 + $0x30] sm:$0xff]
  %v1326 = vld [vmem:[%s5 + $0x38] sm:$0xff]
  %v1327 = vld [vmem:[%s5 + $0x40] sm:$0xff]
  %v1328 = vld [vmem:[%s6] sm:$0x1]
  %v1330 = vlaneseq
  %v1331 = vshrl.u32 %v1330, 7
  %v1332 = vsub.s32 0, %v1331
  %v1333 = vrot.slane %v1328, %v1332
  %vm1335 = vcmask 588800
  %v1337 = vsel %vm1335, %v1318, 0
  %1339 = vmatprep.subr.mxu0 0.0
  %1340 = vmatpush1.msra.mxu0 %v1319
  %1341 = vmatprep.subr.mxu0 0.0
  %1342 = vmatpush1.msra.mxu0 %v1320
  %1343 = vmatprep.subr.mxu0 0.0
  %1344 = vmatpush1.msra.mxu0 %v1321
  %1345 = vmatprep.subr.mxu0 0.0
  %1346 = vmatpush1.msra.mxu0 %v1322
  %1347 = vmatprep.subr.mxu0 0.0
  %1348 = vmatpush1.msra.mxu0 %v1323
  %1349 = vmatprep.subr.mxu0 0.0
  %1350 = vmatpush1.msra.mxu0 %v1324
  %1351 = vmatprep.subr.mxu0 0.0
  %1352 = vmatpush1.msra.mxu0 %v1325
  %1353 = vmatprep.subr.mxu0 0.0
  %1354 = vmatpush1.msra.mxu0 %v1326
  %1355 = vmatprep.subr.mxu0 0.0
  %1356 = vmatpush1.msra.mxu0 %v1327
  %1357 = vmatprep.subr.mxu0 0.0
  %1358 = vmatpush1.msra.mxu0 0.0
  %1359 = vmatprep.subr.mxu0 0.0
  %1360 = vmatpush1.msra.mxu0 0.0
  %1361 = vmatprep.subr.mxu0 0.0
  %1362 = vmatpush1.msra.mxu0 0.0
  %1363 = vmatprep.subr.mxu0 0.0
  %1364 = vmatpush1.msra.mxu0 0.0
  %1365 = vmatprep.subr.mxu0 0.0
  %1366 = vmatpush1.msra.mxu0 0.0
  %1367 = vmatprep.subr.mxu0 0.0
  %1368 = vmatpush1.msra.mxu0 0.0
  %1369 = vmatprep.subr.mxu0 0.0
  %1370 = vmatpush1.msra.mxu0 0.0
  %1371 = vmatprep.subr.mxu0 0.0
  %1372 = vmatpush1.msra.mxu0 0.0
  %1373 = vmatprep.subr.mxu0 0.0
  %1374 = vmatpush1.msra.mxu0 0.0
  %1375 = vmatprep.subr.mxu0 0.0
  %1376 = vmatpush1.msra.mxu0 0.0
  %1377 = vmatprep.subr.mxu0 0.0
  %1378 = vmatpush1.msra.mxu0 0.0
  %1379 = vmatprep.subr.mxu0 0.0
  %1380 = vmatpush1.msra.mxu0 0.0
  %1381 = vmatprep.subr.mxu0 0.0
  %1382 = vmatpush1.msra.mxu0 0.0
  %1383 = vmatprep.subr.mxu0 0.0
  %1384 = vmatpush1.msra.mxu0 0.0
  %1385 = vmatprep.subr.mxu0 0.0
  %1386 = vmatpush1.msra.mxu0 0.0
  %1387 = vmatprep.subr.mxu0 0.0
  %1388 = vmatpush1.msra.mxu0 0.0
  %1389 = vmatprep.subr.mxu0 0.0
  %1390 = vmatpush1.msra.mxu0 0.0
  %1391 = vmatprep.subr.mxu0 0.0
  %1392 = vmatpush1.msra.mxu0 0.0
  %1393 = vmatprep.subr.mxu0 0.0
  %1394 = vmatpush1.msra.mxu0 0.0
  %1395 = vmatprep.subr.mxu0 0.0
  %1396 = vmatpush1.msra.mxu0 0.0
  %1397 = vmatprep.subr.mxu0 0.0
  %1398 = vmatpush1.msra.mxu0 0.0
  %1399 = vmatprep.subr.mxu0 0.0
  %1400 = vmatpush1.msra.mxu0 0.0
  %1401 = vmatprep.subr.mxu0 0.0
  %1402 = vmatpush1.msra.mxu0 0.0
  %1403 = vmatprep.mubr.f32.mxu0 0.0
  %1404 = vmatmul.mubr.f32.gmra.mrb[0].mxu0 %v1337
  %v1405 = vpop.f32.mrb[0].mxu0
  %v1406 = vadd.f32 %v1333, %v1405
  %v1407 = vpop.f32.mrb[0].mxu0
  %1408 = vdwg.mxu0
  %v1409 = vld [vmem:[%s7] sm:$0xff]
  %v1410 = vld [vmem:[%s7 + $0x8] sm:$0xff]
  %v1411 = vld [vmem:[%s7 + $0x10] sm:$0xff]
  %v1412 = vld [vmem:[%s7 + $0x18] sm:$0xff]
  %v1413 = vld [vmem:[%s7 + $0x20] sm:$0xff]
  %v1414 = vld [vmem:[%s7 + $0x28] sm:$0xff]
  %v1415 = vld [vmem:[%s7 + $0x30] sm:$0xff]
  %v1416 = vld [vmem:[%s7 + $0x38] sm:$0xff]
  %v1417 = vld [vmem:[%s8] sm:$0x1]
  %v1418 = vld [vmem:[%s9] sm:$0xff]
  %v1419 = vld [vmem:[%s9 + $0x8] sm:$0xff]
  %v1420 = vld [vmem:[%s9 + $0x10] sm:$0xff]
  %v1421 = vld [vmem:[%s9 + $0x18] sm:$0xff]
  %v1422 = vld [vmem:[%s10] sm:$0x1]
  %v1423 = vlaneseq
  %v1424 = vshrl.u32 %v1423, 7
  %vm1425 = vcmp.eq.s32.totalorder %v1424, 0
  %v1426 = vsel %vm1425, 1.0, -1.0
  %v1428 = vlaneseq
  %v1429 = vshrl.u32 %v1428, 7
  %v1430 = vsub.s32 0, %v1429
  %v1431 = vrot.slane %v1417, %v1430
  %vm1433 = vcmask 261120
  %v1435 = vsel %vm1433, %v1406, 0
  %1437 = vmatprep.subr.mxu0 0.0
  %1438 = vmatpush1.msra.mxu0 %v1409
  %1439 = vmatprep.subr.mxu0 0.0
  %1440 = vmatpush1.msra.mxu0 %v1410
  %1441 = vmatprep.subr.mxu0 0.0
  %1442 = vmatpush1.msra.mxu0 %v1411
  %1443 = vmatprep.subr.mxu0 0.0
  %1444 = vmatpush1.msra.mxu0 %v1412
  %1445 = vmatprep.subr.mxu0 0.0
  %1446 = vmatpush1.msra.mxu0 0.0
  %1447 = vmatprep.subr.mxu0 0.0
  %1448 = vmatpush1.msra.mxu0 0.0
  %1449 = vmatprep.subr.mxu0 0.0
  %1450 = vmatpush1.msra.mxu0 0.0
  %1451 = vmatprep.subr.mxu0 0.0
  %1452 = vmatpush1.msra.mxu0 0.0
  %1453 = vmatprep.subr.mxu0 0.0
  %1454 = vmatpush1.msra.mxu0 0.0
  %1455 = vmatprep.subr.mxu0 0.0
  %1456 = vmatpush1.msra.mxu0 0.0
  %1457 = vmatprep.subr.mxu0 0.0
  %1458 = vmatpush1.msra.mxu0 0.0
  %1459 = vmatprep.subr.mxu0 0.0
  %1460 = vmatpush1.msra.mxu0 0.0
  %1461 = vmatprep.subr.mxu0 0.0
  %1462 = vmatpush1.msra.mxu0 0.0
  %1463 = vmatprep.subr.mxu0 0.0
  %1464 = vmatpush1.msra.mxu0 0.0
  %1465 = vmatprep.subr.mxu0 0.0
  %1466 = vmatpush1.msra.mxu0 0.0
  %1467 = vmatprep.subr.mxu0 0.0
  %1468 = vmatpush1.msra.mxu0 0.0
  %1469 = vmatprep.subr.mxu0 0.0
  %1470 = vmatpush1.msra.mxu0 0.0
  %1471 = vmatprep.subr.mxu0 0.0
  %1472 = vmatpush1.msra.mxu0 0.0
  %1473 = vmatprep.subr.mxu0 0.0
  %1474 = vmatpush1.msra.mxu0 0.0
  %1475 = vmatprep.subr.mxu0 0.0
  %1476 = vmatpush1.msra.mxu0 0.0
  %1477 = vmatprep.subr.mxu0 0.0
  %1478 = vmatpush1.msra.mxu0 0.0
  %1479 = vmatprep.subr.mxu0 0.0
  %1480 = vmatpush1.msra.mxu0 0.0
  %1481 = vmatprep.subr.mxu0 0.0
  %1482 = vmatpush1.msra.mxu0 0.0
  %1483 = vmatprep.subr.mxu0 0.0
  %1484 = vmatpush1.msra.mxu0 0.0
  %1485 = vmatprep.subr.mxu0 0.0
  %1486 = vmatpush1.msra.mxu0 0.0
  %1487 = vmatprep.subr.mxu0 0.0
  %1488 = vmatpush1.msra.mxu0 0.0
  %1489 = vmatprep.subr.mxu0 0.0
  %1490 = vmatpush1.msra.mxu0 0.0
  %1491 = vmatprep.subr.mxu0 0.0
  %1492 = vmatpush1.msra.mxu0 0.0
  %1493 = vmatprep.subr.mxu0 0.0
  %1494 = vmatpush1.msra.mxu0 0.0
  %1495 = vmatprep.subr.mxu0 0.0
  %1496 = vmatpush1.msra.mxu0 0.0
  %1497 = vmatprep.subr.mxu0 0.0
  %1498 = vmatpush1.msra.mxu0 0.0
  %1499 = vmatprep.subr.mxu0 0.0
  %1500 = vmatpush1.msra.mxu0 0.0
  %1501 = vmatprep.mubr.f32.mxu0 0.0
  %1502 = vmatmul.mubr.f32.gmra.mrb[0].mxu0 %v1435
  %v1503 = vpop.f32.mrb[0].mxu0
  %v1504 = vadd.f32 %v1431, %v1503
  %v1505 = vpop.f32.mrb[0].mxu0
  %1506 = vdwg.mxu0
  %v1507 = vxor.u32 %v1504, 2147483648
  %v1508 = vmul.f32 %v1507, 1.442695
  %v1509 = vpow.pop %v1508
  %v1510 = vadd.f32 %v1509, 1.0
  %v1511 = vrcp.pop %v1510
  %v1512 = vmul.f32 1.0, %v1511
  %v1513 = vtanh.pop %v1504
  %1515 = vrot.lane.b32.xlu0 %v1513, 64
  %v1516 = vpop.permute.xlu0 %1515
  %v1518 = vmul.f32 %v1512, %v1516
  %v1519 = vtanh.pop %v1518
  %1521 = vrot.lane.b32.xlu0 %v1519, 96
  %v1522 = vpop.permute.xlu0 %1521
  %v1524 = vmul.f32 %v1512, %v1522
  %v1526 = vlaneseq
  %v1527 = vshrl.u32 %v1526, 7
  %v1528 = vsub.s32 0, %v1527
  %v1529 = vrot.slane %v1422, %v1528
  %1532 = vrot.lane.b32.xlu0 %v1524, 32
  %v1533 = vpop.permute.xlu0 %1532
  %v1534 = vsel %vm1433, %v1533, 0
  %1536 = vmatprep.subr.mxu0 0.0
  %1537 = vmatpush1.msra.mxu0 %v1418
  %1538 = vmatprep.subr.mxu0 0.0
  %1539 = vmatpush1.msra.mxu0 %v1419
  %1540 = vmatprep.subr.mxu0 0.0
  %1541 = vmatpush1.msra.mxu0 %v1420
  %1542 = vmatprep.subr.mxu0 0.0
  %1543 = vmatpush1.msra.mxu0 %v1421
  %1544 = vmatprep.subr.mxu0 0.0
  %1545 = vmatpush1.msra.mxu0 0.0
  %1546 = vmatprep.subr.mxu0 0.0
  %1547 = vmatpush1.msra.mxu0 0.0
  %1548 = vmatprep.subr.mxu0 0.0
  %1549 = vmatpush1.msra.mxu0 0.0
  %1550 = vmatprep.subr.mxu0 0.0
  %1551 = vmatpush1.msra.mxu0 0.0
  %1552 = vmatprep.subr.mxu0 0.0
  %1553 = vmatpush1.msra.mxu0 0.0
  %1554 = vmatprep.subr.mxu0 0.0
  %1555 = vmatpush1.msra.mxu0 0.0
  %1556 = vmatprep.subr.mxu0 0.0
  %1557 = vmatpush1.msra.mxu0 0.0
  %1558 = vmatprep.subr.mxu0 0.0
  %1559 = vmatpush1.msra.mxu0 0.0
  %1560 = vmatprep.subr.mxu0 0.0
  %1561 = vmatpush1.msra.mxu0 0.0
  %1562 = vmatprep.subr.mxu0 0.0
  %1563 = vmatpush1.msra.mxu0 0.0
  %1564 = vmatprep.subr.mxu0 0.0
  %1565 = vmatpush1.msra.mxu0 0.0
  %1566 = vmatprep.subr.mxu0 0.0
  %1567 = vmatpush1.msra.mxu0 0.0
  %1568 = vmatprep.subr.mxu0 0.0
  %1569 = vmatpush1.msra.mxu0 0.0
  %1570 = vmatprep.subr.mxu0 0.0
  %1571 = vmatpush1.msra.mxu0 0.0
  %1572 = vmatprep.subr.mxu0 0.0
  %1573 = vmatpush1.msra.mxu0 0.0
  %1574 = vmatprep.subr.mxu0 0.0
  %1575 = vmatpush1.msra.mxu0 0.0
  %1576 = vmatprep.subr.mxu0 0.0
  %1577 = vmatpush1.msra.mxu0 0.0
  %1578 = vmatprep.subr.mxu0 0.0
  %1579 = vmatpush1.msra.mxu0 0.0
  %1580 = vmatprep.subr.mxu0 0.0
  %1581 = vmatpush1.msra.mxu0 0.0
  %1582 = vmatprep.subr.mxu0 0.0
  %1583 = vmatpush1.msra.mxu0 0.0
  %1584 = vmatprep.subr.mxu0 0.0
  %1585 = vmatpush1.msra.mxu0 0.0
  %1586 = vmatprep.subr.mxu0 0.0
  %1587 = vmatpush1.msra.mxu0 0.0
  %1588 = vmatprep.subr.mxu0 0.0
  %1589 = vmatpush1.msra.mxu0 0.0
  %1590 = vmatprep.subr.mxu0 0.0
  %1591 = vmatpush1.msra.mxu0 0.0
  %1592 = vmatprep.subr.mxu0 0.0
  %1593 = vmatpush1.msra.mxu0 0.0
  %1594 = vmatprep.subr.mxu0 0.0
  %1595 = vmatpush1.msra.mxu0 0.0
  %1596 = vmatprep.subr.mxu0 0.0
  %1597 = vmatpush1.msra.mxu0 0.0
  %1598 = vmatprep.subr.mxu0 0.0
  %1599 = vmatpush1.msra.mxu0 0.0
  %1600 = vmatprep.mubr.f32.mxu0 0.0
  %1601 = vmatmul.mubr.f32.gmra.mrb[0].mxu0 %v1534
  %v1602 = vpop.f32.mrb[0].mxu0
  %v1603 = vadd.f32 %v1529, %v1602
  %v1604 = vpop.f32.mrb[0].mxu0
  %1605 = vdwg.mxu0
  %v1606 = vmul.f32 %v1603, %v1426
  %vm1607 = vcmask 123904
  %v1608 = vsel %vm1607, %v1606, 0.0
  %v1609 = vrot.slane %v1608, 4
  %v1610 = vadd.f32 %v1608, %v1609
  %v1611 = vrot.slane %v1610, 2
  %v1612 = vadd.f32 %v1610, %v1611
  %v1613 = vrot.slane %v1612, 1
  %v1614 = vadd.f32 %v1612, %v1613
  %v1615 = vand.u32 2147483647, %v1614
  %v1616 = vrot.slane %v1524, 6
  %1617 = vrot.lane.b32.xlu0 %v1616, 64
  %v1618 = vpop.permute.xlu0 %1617
  %v1620 = vsel %vm1433, %v1406, %v1618
  %v1622 = vrot.slane %v1620, 2
  %vm1623 = vcmask 523264
  %v1624 = vsel %vm1623, %v1622, 0
  %1626 = vmatprep.subr.mxu0 0.0
  %1627 = vmatpush1.msra.mxu0 %v1409
  %1628 = vmatprep.subr.mxu0 0.0
  %1629 = vmatpush1.msra.mxu0 %v1410
  %1630 = vmatprep.subr.mxu0 0.0
  %1631 = vmatpush1.msra.mxu0 %v1411
  %1632 = vmatprep.subr.mxu0 0.0
  %1633 = vmatpush1.msra.mxu0 %v1412
  %1634 = vmatprep.subr.mxu0 0.0
  %1635 = vmatpush1.msra.mxu0 %v1413
  %1636 = vmatprep.subr.mxu0 0.0
  %1637 = vmatpush1.msra.mxu0 %v1414
  %1638 = vmatprep.subr.mxu0 0.0
  %1639 = vmatpush1.msra.mxu0 %v1415
  %1640 = vmatprep.subr.mxu0 0.0
  %1641 = vmatpush1.msra.mxu0 %v1416
  %1642 = vmatprep.subr.mxu0 0.0
  %1643 = vmatpush1.msra.mxu0 0.0
  %1644 = vmatprep.subr.mxu0 0.0
  %1645 = vmatpush1.msra.mxu0 0.0
  %1646 = vmatprep.subr.mxu0 0.0
  %1647 = vmatpush1.msra.mxu0 0.0
  %1648 = vmatprep.subr.mxu0 0.0
  %1649 = vmatpush1.msra.mxu0 0.0
  %1650 = vmatprep.subr.mxu0 0.0
  %1651 = vmatpush1.msra.mxu0 0.0
  %1652 = vmatprep.subr.mxu0 0.0
  %1653 = vmatpush1.msra.mxu0 0.0
  %1654 = vmatprep.subr.mxu0 0.0
  %1655 = vmatpush1.msra.mxu0 0.0
  %1656 = vmatprep.subr.mxu0 0.0
  %1657 = vmatpush1.msra.mxu0 0.0
  %1658 = vmatprep.subr.mxu0 0.0
  %1659 = vmatpush1.msra.mxu0 0.0
  %1660 = vmatprep.subr.mxu0 0.0
  %1661 = vmatpush1.msra.mxu0 0.0
  %1662 = vmatprep.subr.mxu0 0.0
  %1663 = vmatpush1.msra.mxu0 0.0
  %1664 = vmatprep.subr.mxu0 0.0
  %1665 = vmatpush1.msra.mxu0 0.0
  %1666 = vmatprep.subr.mxu0 0.0
  %1667 = vmatpush1.msra.mxu0 0.0
  %1668 = vmatprep.subr.mxu0 0.0
  %1669 = vmatpush1.msra.mxu0 0.0
  %1670 = vmatprep.subr.mxu0 0.0
  %1671 = vmatpush1.msra.mxu0 0.0
  %1672 = vmatprep.subr.mxu0 0.0
  %1673 = vmatpush1.msra.mxu0 0.0
  %1674 = vmatprep.subr.mxu0 0.0
  %1675 = vmatpush1.msra.mxu0 0.0
  %1676 = vmatprep.subr.mxu0 0.0
  %1677 = vmatpush1.msra.mxu0 0.0
  %1678 = vmatprep.subr.mxu0 0.0
  %1679 = vmatpush1.msra.mxu0 0.0
  %1680 = vmatprep.subr.mxu0 0.0
  %1681 = vmatpush1.msra.mxu0 0.0
  %1682 = vmatprep.subr.mxu0 0.0
  %1683 = vmatpush1.msra.mxu0 0.0
  %1684 = vmatprep.subr.mxu0 0.0
  %1685 = vmatpush1.msra.mxu0 0.0
  %1686 = vmatprep.subr.mxu0 0.0
  %1687 = vmatpush1.msra.mxu0 0.0
  %1688 = vmatprep.subr.mxu0 0.0
  %1689 = vmatpush1.msra.mxu0 0.0
  %1690 = vmatprep.mubr.f32.mxu0 0.0
  %1691 = vmatmul.mubr.f32.gmra.mrb[0].mxu0 %v1624
  %v1692 = vpop.f32.mrb[0].mxu0
  %v1693 = vadd.f32 %v1431, %v1692
  %v1694 = vpop.f32.mrb[0].mxu0
  %1695 = vdwg.mxu0
  %v1696 = vxor.u32 %v1693, 2147483648
  %v1697 = vmul.f32 %v1696, 1.442695
  %v1698 = vpow.pop %v1697
  %v1699 = vadd.f32 %v1698, 1.0
  %v1700 = vrcp.pop %v1699
  %v1701 = vmul.f32 1.0, %v1700
  %v1702 = vtanh.pop %v1693
  %1704 = vrot.lane.b32.xlu0 %v1518, 32
  %v1705 = vpop.permute.xlu0 %1704
  %v1707 = vmul.f32 %v1701, %v1705
  %1709 = vrot.lane.b32.xlu0 %v1702, 64
  %v1710 = vpop.permute.xlu0 %1709
  %v1712 = vmul.f32 %v1701, %v1710
  %1714 = vrot.lane.b32.xlu0 %v1712, 32
  %v1715 = vpop.permute.xlu0 %1714
  %v1717 = vadd.f32 %v1707, %v1715
  %v1718 = vtanh.pop %v1717
  %1720 = vrot.lane.b32.xlu0 %v1718, 64
  %v1721 = vpop.permute.xlu0 %1720
  %v1723 = vmul.f32 %v1701, %v1721
  %1725 = vrot.lane.b32.xlu0 %v1723, 32
  %v1726 = vpop.permute.xlu0 %1725
  %v1727 = vsel %vm1433, %v1726, 0
  %1729 = vmatprep.subr.mxu0 0.0
  %1730 = vmatpush1.msra.mxu0 %v1418
  %1731 = vmatprep.subr.mxu0 0.0
  %1732 = vmatpush1.msra.mxu0 %v1419
  %1733 = vmatprep.subr.mxu0 0.0
  %1734 = vmatpush1.msra.mxu0 %v1420
  %1735 = vmatprep.subr.mxu0 0.0
  %1736 = vmatpush1.msra.mxu0 %v1421
  %1737 = vmatprep.subr.mxu0 0.0
  %1738 = vmatpush1.msra.mxu0 0.0
  %1739 = vmatprep.subr.mxu0 0.0
  %1740 = vmatpush1.msra.mxu0 0.0
  %1741 = vmatprep.subr.mxu0 0.0
  %1742 = vmatpush1.msra.mxu0 0.0
  %1743 = vmatprep.subr.mxu0 0.0
  %1744 = vmatpush1.msra.mxu0 0.0
  %1745 = vmatprep.subr.mxu0 0.0
  %1746 = vmatpush1.msra.mxu0 0.0
  %1747 = vmatprep.subr.mxu0 0.0
  %1748 = vmatpush1.msra.mxu0 0.0
  %1749 = vmatprep.subr.mxu0 0.0
  %1750 = vmatpush1.msra.mxu0 0.0
  %1751 = vmatprep.subr.mxu0 0.0
  %1752 = vmatpush1.msra.mxu0 0.0
  %1753 = vmatprep.subr.mxu0 0.0
  %1754 = vmatpush1.msra.mxu0 0.0
  %1755 = vmatprep.subr.mxu0 0.0
  %1756 = vmatpush1.msra.mxu0 0.0
  %1757 = vmatprep.subr.mxu0 0.0
  %1758 = vmatpush1.msra.mxu0 0.0
  %1759 = vmatprep.subr.mxu0 0.0
  %1760 = vmatpush1.msra.mxu0 0.0
  %1761 = vmatprep.subr.mxu0 0.0
  %1762 = vmatpush1.msra.mxu0 0.0
  %1763 = vmatprep.subr.mxu0 0.0
  %1764 = vmatpush1.msra.mxu0 0.0
  %1765 = vmatprep.subr.mxu0 0.0
  %1766 = vmatpush1.msra.mxu0 0.0
  %1767 = vmatprep.subr.mxu0 0.0
  %1768 = vmatpush1.msra.mxu0 0.0
  %1769 = vmatprep.subr.mxu0 0.0
  %1770 = vmatpush1.msra.mxu0 0.0
  %1771 = vmatprep.subr.mxu0 0.0
  %1772 = vmatpush1.msra.mxu0 0.0
  %1773 = vmatprep.subr.mxu0 0.0
  %1774 = vmatpush1.msra.mxu0 0.0
  %1775 = vmatprep.subr.mxu0 0.0
  %1776 = vmatpush1.msra.mxu0 0.0
  %1777 = vmatprep.subr.mxu0 0.0
  %1778 = vmatpush1.msra.mxu0 0.0
  %1779 = vmatprep.subr.mxu0 0.0
  %1780 = vmatpush1.msra.mxu0 0.0
  %1781 = vmatprep.subr.mxu0 0.0
  %1782 = vmatpush1.msra.mxu0 0.0
  %1783 = vmatprep.subr.mxu0 0.0
  %1784 = vmatpush1.msra.mxu0 0.0
  %1785 = vmatprep.subr.mxu0 0.0
  %1786 = vmatpush1.msra.mxu0 0.0
  %1787 = vmatprep.subr.mxu0 0.0
  %1788 = vmatpush1.msra.mxu0 0.0
  %1789 = vmatprep.subr.mxu0 0.0
  %1790 = vmatpush1.msra.mxu0 0.0
  %1791 = vmatprep.subr.mxu0 0.0
  %1792 = vmatpush1.msra.mxu0 0.0
  %1793 = vmatprep.mubr.f32.mxu0 0.0
  %1794 = vmatmul.mubr.f32.gmra.mrb[0].mxu0 %v1727
  %v1795 = vpop.f32.mrb[0].mxu0
  %v1796 = vadd.f32 %v1529, %v1795
  %v1797 = vpop.f32.mrb[0].mxu0
  %1798 = vdwg.mxu0
  %v1799 = vmul.f32 %v1796, %v1426
  %v1800 = vsel %vm1607, %v1799, 0.0
  %v1801 = vrot.slane %v1800, 4
  %v1802 = vadd.f32 %v1800, %v1801
  %v1803 = vrot.slane %v1802, 2
  %v1804 = vadd.f32 %v1802, %v1803
  %v1805 = vrot.slane %v1804, 1
  %v1806 = vadd.f32 %v1804, %v1805
  %v1807 = vand.u32 2147483647, %v1806
  %vm1808 = vcmask 1040384
  %v1809 = vsel %vm1808, %v1615, %v1807
  %v1810 = vld [vmem:[%s11] sm:$0x1]
  %v1812 = vlaneseq
  %v1813 = vshrl.u32 %v1812, 7
  %v1814 = vsub.s32 0, %v1813
  %v1815 = vrot.slane %v1810, %v1814
  %v1817 = vmul.f32 %v1809, %v1815
  %v1818 = vsel %vm1607, %v1817, 0.0
  %1819 = vadd.xlane.f32.xlu0 %v1818
  %v1820 = vpop.xlane.xlu0 %1819
  %v1821 = vld [vmem:[#allocation2] sm:$0x1]
  %v1823 = vlaneseq
  %v1824 = vshrl.u32 %v1823, 7
  %v1825 = vsub.s32 0, %v1824
  %v1826 = vrot.slane %v1821, %v1825
  %v1828 = vadd.f32 %v1820, %v1826
  %v1829 = vxor.u32 %v1828, 2147483648
  %v1830 = vmul.f32 %v1829, 1.442695
  %v1831 = vpow.pop %v1830
  %v1832 = vadd.f32 %v1831, 1.0
  %v1833 = vrcp.pop %v1832
  %v1834 = vmul.f32 1.0, %v1833
  %vm1835 = vcmask 1024
  %1836 = vst.msk [vmem:[%s13] sm:$0x3] %vm1835, %v1834
  // Predicated region
  $region54: #{vrkinnn_forward.1} parent=0 // pred_check
    _
  $region55: #{vrkinnn_forward.1} parent=0 // pred_check_branch
    %1838 = sbr.rel (0) target = $region57
  $region56: #{vrkinnn_forward.1} parent=0 // pred_region
    _
  $region57: #{vrkinnn_forward.1} parent=0 // pred_fallthru
    _
  // Predicated region
  $region58: #{vrkinnn_forward.1} parent=0 // pred_check
    _
  $region59: #{vrkinnn_forward.1} parent=0 // pred_check_branch
    %1840 = sbr.rel (0) target = $region61
  $region60: #{vrkinnn_forward.1} parent=0 // pred_region
    _
  $region61: #{vrkinnn_forward.1} parent=0 // pred_fallthru
    _

</llo_original>
